<compile_context>
chip_gen: v7x
topology: tpu7x:2x2x1
jax: 0.10.0
libtpu: 0.0.40
codegen_flags: <defaults>
</compile_context>

<pallas_src>
import functools

import jax
import jax.numpy as jnp
from jax.experimental import pallas as pl
from jax.experimental.pallas import tpu as pltpu


def fold_bn(gamma, beta, running_mean, running_var, eps=1e-5):
    """Inference-mode BatchNorm2d folded to y = x * scale + bias."""
    inv = gamma / jnp.sqrt(running_var + eps)
    return inv, beta - running_mean * inv


def _round_up(x, m):
    return (x + m - 1) // m * m


def _pick_rows(h_out, row_tile):
    """Output-row strip height: either the full image or a multiple of 8."""
    th = min(max(1, row_tile), h_out)
    if th < h_out:
        th = min(max(8, (th // 8) * 8), h_out)
    return th


@functools.lru_cache(maxsize=None)
def _pltpu_roll_sign():
    """Probe pltpu.roll's shift direction once with a tiny single-tile kernel.

    Returns +1 if pltpu.roll matches jnp.roll (positive shift moves elements
    toward higher lane indices), -1 otherwise.
    """
    def probe(o_ref):
        o_ref[...] = pltpu.roll(
            jax.lax.broadcasted_iota(jnp.float32, (8, 128), 1), 1, 1)

    out = pl.pallas_call(
        probe, out_shape=jax.ShapeDtypeStruct((8, 128), jnp.float32))()
    return 1 if float(out[0, 1]) == 0.0 else -1


# ----------------------------------------------------------------------------
# Depthwise ConvBlock, lane-dense path (C < 128, stride 1)
#
# Padded scratch row layout: [image row (w*c lanes) | zeros (wpc - w*c lanes)],
# wpc a multiple of 128.  A tap's kw offset becomes a lane roll by (kw-pad)*c;
# the trailing zero region supplies BOTH left and right W padding through the
# roll's wrap-around.  H padding is physical zero rows in the scratch.
# ----------------------------------------------------------------------------
def _fill_padded_lane_dense(pad_ref, x_ref, h, wc, pad):
    """Zero only the halo ring (incl. ragged-strip extension rows), then copy
    the image (lane offset 0, so the copy is lane-aligned)."""
    hp, wpc = pad_ref.shape
    dt = pad_ref.dtype
    if pad > 0:
        pad_ref[:pad, :] = jnp.zeros((pad, wpc), dt)
    if hp > pad + h:
        pad_ref[pad + h:, :] = jnp.zeros((hp - pad - h, wpc), dt)
    if wpc > wc:
        pad_ref[pad:pad + h, wc:] = jnp.zeros((h, wpc - wc), dt)
    pad_ref[pad:pad + h, :wc] = x_ref[...]


def _dw_kernel_lane_dense(x_ref, w_ref, b_ref, o_ref, pad_ref, *,
                          th, h, wc, w_out_c, c, ksize, pad, wpc, roll_sign):
    t = pl.program_id(1)

    @pl.when(t == 0)                      # new image: rebuild padded copy
    def _():
        _fill_padded_lane_dense(pad_ref, x_ref, h, wc, pad)

    chunk = min(8, th)                    # 8 output rows -> register-resident acc
    for r0 in range(0, th, chunk):        # static unroll
        nrows = min(chunk, th - r0)
        row0 = pl.multiple_of(t * th + r0, 8)      # 8-aligned by construction
        slab = pad_ref[pl.ds(row0, nrows + ksize - 1), :]   # one aligned load
        acc = jnp.zeros((nrows, wpc), jnp.float32)
        for kh in range(ksize):
            rows = slab[kh:kh + nrows]             # static sublane slice
            for kw in range(ksize):
                shift = (roll_sign * (pad - kw) * c) % wpc
                shifted = rows if shift == 0 else pltpu.roll(rows, shift, 1)
                acc = acc + shifted * w_ref[kh * ksize + kw, :]   # bf16*f32 -> f32
        y = acc[:, :w_out_c] + b_ref[...]
        o_ref[pl.ds(r0, nrows), :] = jnp.maximum(y, 0.0).astype(o_ref.dtype)


def _dw_call_lane_dense(x_nhwc, w_folded, bias, *, ksize, pad, row_tile,
                        roll_sign):
    n, h, w, c = x_nhwc.shape
    h_out = h + 2 * pad - ksize + 1
    w_out = w + 2 * pad - ksize + 1
    th = _pick_rows(h_out, row_tile)
    n_strips = pl.cdiv(h_out, th)
    hp = max(n_strips * th - 1 + ksize, h + 2 * pad)
    wc, w_out_c = w * c, w_out * c
    wpc = _round_up((w + 2 * pad) * c, 128)        # lane-aligned padded width

    x2 = x_nhwc.reshape(n, h, wc)                  # free HBM reshape
    reps = -(-wpc // c)
    w_lane = jnp.tile(w_folded.reshape(ksize * ksize, c),
                      (1, reps))[:, :wpc].astype(jnp.float32)
    b_lane = jnp.tile(bias.reshape(1, c), (1, w_out)).astype(jnp.float32)

    kernel = functools.partial(_dw_kernel_lane_dense, th=th, h=h, wc=wc,
                               w_out_c=w_out_c, c=c, ksize=ksize, pad=pad,
                               wpc=wpc, roll_sign=roll_sign)
    out = pl.pallas_call(
        kernel,
        out_shape=jax.ShapeDtypeStruct((n, h_out, w_out_c), x_nhwc.dtype),
        grid_spec=pltpu.PrefetchScalarGridSpec(
            num_scalar_prefetch=0,
            grid=(n, n_strips),                    # batch parallel, strips seq.
            in_specs=[
                pl.BlockSpec((None, h, wc), lambda b, t: (b, 0, 0)),
                pl.BlockSpec((ksize * ksize, wpc), lambda b, t: (0, 0)),
                pl.BlockSpec((1, w_out_c), lambda b, t: (0, 0)),
            ],
            out_specs=pl.BlockSpec((None, th, w_out_c), lambda b, t: (b, t, 0)),
            scratch_shapes=[pltpu.VMEM((hp, wpc), x_nhwc.dtype)],
        ),
        compiler_params=pltpu.CompilerParams(
            dimension_semantics=("parallel", "arbitrary")),
    )(x2, w_lane, b_lane)
    return out.reshape(n, h_out, w_out, c)


# ----------------------------------------------------------------------------
# Depthwise ConvBlock, generic NHWC path (any stride, any C)
# ----------------------------------------------------------------------------
def _fill_padded_nhwc(pad_ref, x_ref, h, w, pad):
    """Zero only the halo ring (+ ragged-strip extension rows), then copy."""
    hp, wp, c = pad_ref.shape
    dt = pad_ref.dtype
    if pad > 0:
        pad_ref[:pad, :, :] = jnp.zeros((pad, wp, c), dt)
        pad_ref[pad:pad + h, :pad, :] = jnp.zeros((h, pad, c), dt)
        pad_ref[pad:pad + h, pad + w:, :] = jnp.zeros((h, wp - pad - w, c), dt)
    if hp > pad + h:
        pad_ref[pad + h:, :, :] = jnp.zeros((hp - pad - h, wp, c), dt)
    pad_ref[pad:pad + h, pad:pad + w, :] = x_ref[...]


def _dw_tap_acc_nhwc(pad_ref, w_ref, row0, nrows, w_out, stride, ksize):
    """k*k-tap depthwise accumulation for `nrows` output rows (f32 acc)."""
    c = pad_ref.shape[-1]
    rspan = (nrows - 1) * stride + 1
    cspan = (w_out - 1) * stride + 1
    acc = jnp.zeros((nrows, w_out, c), jnp.float32)
    for kh in range(ksize):
        rows = pad_ref[pl.ds(row0 + kh, rspan), :, :]
        if stride > 1:
            rows = rows[::stride]
        for kw in range(ksize):
            patch = rows[:, kw:kw + cspan:stride, :]
            acc = acc + patch.astype(jnp.float32) * w_ref[kh, kw, :].astype(jnp.float32)
    return acc


def _dw_kernel_nhwc(x_ref, w_ref, b_ref, o_ref, pad_ref, *,
                    th, h, w, w_out, stride, ksize, pad):
    t = pl.program_id(1)

    @pl.when(t == 0)
    def _():
        _fill_padded_nhwc(pad_ref, x_ref, h, w, pad)

    chunk = min(8, th)
    for r0 in range(0, th, chunk):
        nrows = min(chunk, th - r0)
        row0 = (t * th + r0) * stride
        acc = _dw_tap_acc_nhwc(pad_ref, w_ref, row0, nrows, w_out, stride, ksize)
        y = acc + b_ref[0].astype(jnp.float32)
        o_ref[pl.ds(r0, nrows), :, :] = jnp.maximum(y, 0.0).astype(o_ref.dtype)


def _dw_call_nhwc(x_nhwc, w_folded, bias, *, ksize, stride, pad, row_tile):
    n, h, w, c = x_nhwc.shape
    h_out = (h + 2 * pad - ksize) // stride + 1
    w_out = (w + 2 * pad - ksize) // stride + 1
    th = _pick_rows(h_out, row_tile)
    n_strips = pl.cdiv(h_out, th)
    wp = w + 2 * pad
    hp = max((n_strips * th - 1) * stride + ksize, h + 2 * pad)

    kernel = functools.partial(_dw_kernel_nhwc, th=th, h=h, w=w, w_out=w_out,
                               stride=stride, ksize=ksize, pad=pad)
    return pl.pallas_call(
        kernel,
        out_shape=jax.ShapeDtypeStruct((n, h_out, w_out, c), x_nhwc.dtype),
        grid_spec=pltpu.PrefetchScalarGridSpec(
            num_scalar_prefetch=0,
            grid=(n, n_strips),
            in_specs=[
                pl.BlockSpec((None, h, w, c), lambda b, t: (b, 0, 0, 0)),
                pl.BlockSpec((ksize, ksize, c), lambda b, t: (0, 0, 0)),
                pl.BlockSpec((1, c), lambda b, t: (0, 0)),
            ],
            out_specs=pl.BlockSpec((None, th, w_out, c), lambda b, t: (b, t, 0, 0)),
            scratch_shapes=[pltpu.VMEM((hp, wp, c), x_nhwc.dtype)],
        ),
        compiler_params=pltpu.CompilerParams(
            dimension_semantics=("parallel", "arbitrary")),
    )(x_nhwc, w_folded, bias.reshape(1, c).astype(jnp.float32))


def dw_conv_bn_relu(x_nhwc, w_dw, scale, bias, *, stride=1, padding=1,
                    row_tile=8, use_lane_dense=True):
    """Depthwise ConvBlock: KxK conv (groups=C, no bias) + folded BN + ReLU."""
    c = x_nhwc.shape[-1]
    ksize = w_dw.shape[0]
    w_folded = (w_dw * scale[None, None, :]).astype(jnp.float32)
    bias_f = bias.astype(jnp.float32)

    if use_lane_dense and stride == 1 and c < 128:
        try:
            out = _dw_call_lane_dense(x_nhwc, w_folded, bias_f, ksize=ksize,
                                      pad=padding, row_tile=row_tile,
                                      roll_sign=_pltpu_roll_sign())
            # Force compile+execute here so a lowering problem (if any) falls
            # back to the generic NHWC kernel instead of failing the model.
            return jax.block_until_ready(out)
        except Exception:
            pass
    return _dw_call_nhwc(x_nhwc, w_folded, bias_f, ksize=ksize, stride=stride,
                         pad=padding, row_tile=row_tile)


# ----------------------------------------------------------------------------
# Pointwise 1x1 ConvBlock (MXU matmul hot path, bf16 operands / f32 acc)
# ----------------------------------------------------------------------------
def _pw_kernel(x_ref, w_ref, b_ref, o_ref):
    x = x_ref[...].astype(jnp.bfloat16)            # no-op if input already bf16
    acc = jnp.dot(x, w_ref[...], preferred_element_type=jnp.float32)
    o_ref[...] = jnp.maximum(acc + b_ref[...], 0.0).astype(o_ref.dtype)


def pw_conv_bn_relu(x_nhwc, w_pw, scale, bias, *, row_tile=1024):
    """Pointwise ConvBlock: 1x1 conv (no bias) + folded BN + ReLU."""
    n, h, w, cin = x_nhwc.shape
    cout = w_pw.shape[1]
    m = n * h * w
    x2 = x_nhwc.reshape(m, cin)                    # NHWC -> (M, Cin), free

    if m <= row_tile:
        tm = m
    elif row_tile >= 256:
        tm = (row_tile // 256) * 256               # MXU-aligned M tiles
    else:
        tm = max(8, (row_tile // 8) * 8)
    grid_m = pl.cdiv(m, tm)                        # ragged tail masked by Pallas

    w_q = (w_pw * scale[None, :]).astype(jnp.bfloat16)   # BN scale folded
    b2 = bias.reshape(1, cout).astype(jnp.float32)

    out2 = pl.pallas_call(
        _pw_kernel,
        out_shape=jax.ShapeDtypeStruct((m, cout), x_nhwc.dtype),
        grid_spec=pltpu.PrefetchScalarGridSpec(
            num_scalar_prefetch=0,
            grid=(grid_m,),
            in_specs=[
                pl.BlockSpec((tm, cin), lambda i: (i, 0)),
                pl.BlockSpec((cin, cout), lambda i: (0, 0)),
                pl.BlockSpec((1, cout), lambda i: (0, 0)),
            ],
            out_specs=pl.BlockSpec((tm, cout), lambda i: (i, 0)),
        ),
        compiler_params=pltpu.CompilerParams(dimension_semantics=("parallel",)),
    )(x2, w_q, b2)
    return out2.reshape(n, h, w, cout)


# ----------------------------------------------------------------------------
# ConvBlock forward (the PyTorch module) + fused depthwise-separable variant
# ----------------------------------------------------------------------------
def conv_block(x_nhwc, weight, bn_params, *, stride=1, padding=0, groups=1,
               bn_eps=1e-5, row_tile=None, use_lane_dense=True):
    """One ConvBlock forward (conv -> BN(inference) -> ReLU), NHWC in / out.

    Weight layouts:
      depthwise (groups == C_in): (K, K, C)       [PyTorch (C, 1, K, K)]
      pointwise (groups == 1, 1x1): (Cin, Cout)   [PyTorch (Cout, Cin, 1, 1)]
    """
    scale, bias = fold_bn(*bn_params, eps=bn_eps)
    cin = x_nhwc.shape[-1]
    if weight.ndim == 3 and groups == cin:
        return dw_conv_bn_relu(x_nhwc, weight, scale, bias, stride=stride,
                               padding=padding, row_tile=row_tile or 8,
                               use_lane_dense=use_lane_dense)
    if weight.ndim == 2 and groups == 1 and stride == 1 and padding == 0:
        return pw_conv_bn_relu(x_nhwc, weight, scale, bias,
                               row_tile=row_tile or 1024)
    raise NotImplementedError(
        "only the depthwise and pointwise ConvBlock configurations used by "
        "MobileNetV1's depthwise-separable stages are implemented")


def _dws_fused_kernel(x_ref, wdw_ref, bdw_ref, wpw_ref, bpw_ref, o_ref,
                      pad_ref, *, th, h, w, w_out, stride, ksize, pad):
    """Fused depthwise ConvBlock + pointwise ConvBlock for one H-strip; the
    depthwise intermediate stays in VMEM/registers and feeds the MXU."""
    t = pl.program_id(1)

    @pl.when(t == 0)
    def _():
        _fill_padded_nhwc(pad_ref, x_ref, h, w, pad)

    cin = pad_ref.shape[-1]
    cout = o_ref.shape[-1]
    row0 = t * th * stride
    acc = _dw_tap_acc_nhwc(pad_ref, wdw_ref, row0, th, w_out, stride, ksize)
    a = jnp.maximum(acc + bdw_ref[0].astype(jnp.float32), 0.0)
    # th is chosen so the MXU M dim (th*w_out) is >= 256; this reshape is
    # layout-free when w_out % 8 == 0 (sublane tiling preserved).
    a2 = a.reshape(th * w_out, cin).astype(jnp.bfloat16)
    z = jnp.dot(a2, wpw_ref[...], preferred_element_type=jnp.float32)
    z = jnp.maximum(z + bpw_ref[...], 0.0)
    o_ref[...] = z.reshape(th, w_out, cout).astype(o_ref.dtype)


def dws_conv_block_fused(x_nhwc, dw_weight, dw_bn, pw_weight, pw_bn, *,
                         stride=1, padding=1, row_tile=None, bn_eps=1e-5):
    """Two fused ConvBlocks (depthwise then pointwise) in one pallas_call."""
    dw_scale, dw_bias = fold_bn(*dw_bn, eps=bn_eps)
    pw_scale, pw_bias = fold_bn(*pw_bn, eps=bn_eps)

    n, h, w, cin = x_nhwc.shape
    cout = pw_weight.shape[1]
    ksize = dw_weight.shape[0]
    h_out = (h + 2 * padding - ksize) // stride + 1
    w_out = (w + 2 * padding - ksize) // stride + 1
    if row_tile is None:
        row_tile = max(8, -(-256 // w_out))        # target th*w_out >= 256
    th = _pick_rows(h_out, row_tile)
    n_strips = pl.cdiv(h_out, th)
    wp = w + 2 * padding
    hp = max((n_strips * th - 1) * stride + ksize, h + 2 * padding)

    w_dw_f = (dw_weight * dw_scale[None, None, :]).astype(jnp.float32)
    b_dw = dw_bias.reshape(1, cin).astype(jnp.float32)
    w_pw_q = (pw_weight * pw_scale[None, :]).astype(jnp.bfloat16)
    b_pw = pw_bias.reshape(1, cout).astype(jnp.float32)

    kernel = functools.partial(_dws_fused_kernel, th=th, h=h, w=w, w_out=w_out,
                               stride=stride, ksize=ksize, pad=padding)
    return pl.pallas_call(
        kernel,
        out_shape=jax.ShapeDtypeStruct((n, h_out, w_out, cout), x_nhwc.dtype),
        grid_spec=pltpu.PrefetchScalarGridSpec(
            num_scalar_prefetch=0,
            grid=(n, n_strips),
            in_specs=[
                pl.BlockSpec((None, h, w, cin), lambda b, t: (b, 0, 0, 0)),
                pl.BlockSpec((ksize, ksize, cin), lambda b, t: (0, 0, 0)),
                pl.BlockSpec((1, cin), lambda b, t: (0, 0)),
                pl.BlockSpec((cin, cout), lambda b, t: (0, 0)),
                pl.BlockSpec((1, cout), lambda b, t: (0, 0)),
            ],
            out_specs=pl.BlockSpec((None, th, w_out, cout),
                                   lambda b, t: (b, t, 0, 0)),
            scratch_shapes=[pltpu.VMEM((hp, wp, cin), x_nhwc.dtype)],
        ),
        compiler_params=pltpu.CompilerParams(
            dimension_semantics=("parallel", "arbitrary")),
    )(x_nhwc, w_dw_f, b_dw, w_pw_q, b_pw)


# ----------------------------------------------------------------------------
# Pure-JAX references (same folded-BN / bf16 math) for validation
# ----------------------------------------------------------------------------
def _ref_dw_block(x_nhwc, w_dw, bn, *, stride, padding, eps=1e-5):
    scale, bias = fold_bn(*bn, eps=eps)
    c = x_nhwc.shape[-1]
    k = w_dw.shape[0]
    wf = (w_dw * scale[None, None, :]).reshape(k, k, 1, c).astype(jnp.float32)
    y = jax.lax.conv_general_dilated(
        x_nhwc.astype(jnp.float32), wf, window_strides=(stride, stride),
        padding=((padding, padding), (padding, padding)),
        dimension_numbers=("NHWC", "HWIO", "NHWC"),
        feature_group_count=c, precision=jax.lax.Precision.HIGHEST)
    return jnp.maximum(y + bias, 0.0)


def _ref_pw_block(x_nhwc, w_pw, bn, *, eps=1e-5):
    scale, bias = fold_bn(*bn, eps=eps)
    wq = (w_pw * scale[None, :]).astype(jnp.bfloat16).astype(jnp.float32)
    xq = x_nhwc.astype(jnp.bfloat16).astype(jnp.float32)
    y = jnp.einsum("nhwc,co->nhwo", xq, wq, precision=jax.lax.Precision.HIGHEST)
    return jnp.maximum(y + bias, 0.0)


def init_params(key, in_channels, out_channels):
    ks = jax.random.split(key, 10)
    # PyTorch depthwise weight (C,1,K,K) stored as (K,K,C);
    # pointwise (Cout,Cin,1,1) stored as (Cin,Cout).
    dw_w = jax.random.normal(ks[0], (3, 3, in_channels), jnp.float32) * 0.2
    pw_w = jax.random.normal(ks[1], (in_channels, out_channels), jnp.float32) * 0.2
    dw_bn = (
        jax.random.normal(ks[2], (in_channels,)) * 0.1 + 1.0,             # gamma
        jax.random.normal(ks[3], (in_channels,)) * 0.1,                   # beta
        jax.random.normal(ks[4], (in_channels,)) * 0.1,                   # running_mean
        jnp.abs(jax.random.normal(ks[5], (in_channels,))) * 0.1 + 1.0,    # running_var
    )
    pw_bn = (
        jax.random.normal(ks[6], (out_channels,)) * 0.1 + 1.0,
        jax.random.normal(ks[7], (out_channels,)) * 0.1,
        jax.random.normal(ks[8], (out_channels,)) * 0.1,
        jnp.abs(jax.random.normal(ks[9], (out_channels,))) * 0.1 + 1.0,
    )
    return {"dw_w": dw_w, "pw_w": pw_w, "dw_bn": dw_bn, "pw_bn": pw_bn}


if __name__ == "__main__":
    key = jax.random.PRNGKey(0)
    kx, kp = jax.random.split(key)

    N, C_IN, C_OUT, HW = 2, 8, 16, 16
    x_nchw = jax.random.normal(kx, (N, C_IN, HW, HW), jnp.float32)  # PyTorch layout
    params = init_params(kp, C_IN, C_OUT)

    # Layout + dtype conversion once at model entry; kernels stay NHWC/bf16.
    x = jnp.transpose(x_nchw, (0, 2, 3, 1)).astype(jnp.bfloat16)

    # ConvBlock #1: depthwise 3x3, groups=C_IN, padding=1, stride=1.
    y_dw = conv_block(x, params["dw_w"], params["dw_bn"],
                      stride=1, padding=1, groups=C_IN)
    # ConvBlock #2: pointwise 1x1, groups=1.
    y_pw = conv_block(y_dw, params["pw_w"], params["pw_bn"],
                      stride=1, padding=0, groups=1)
    # Fused variant: both ConvBlocks in one pallas_call.
    y_fused = dws_conv_block_fused(x, params["dw_w"], params["dw_bn"],
                                   params["pw_w"], params["pw_bn"],
                                   stride=1, padding=1)
    # Also exercise the generic NHWC-layout depthwise kernel explicitly.
    dw_scale, dw_bias = fold_bn(*params["dw_bn"])
    y_dw_generic = dw_conv_bn_relu(x, params["dw_w"], dw_scale, dw_bias,
                                   stride=1, padding=1, use_lane_dense=False)

    out_nchw = jnp.transpose(y_pw, (0, 3, 1, 2))   # back to PyTorch layout
    jax.block_until_ready((y_dw, y_pw, y_fused, y_dw_generic, out_nchw))

    assert y_dw.shape == (N, HW, HW, C_IN), y_dw.shape
    assert y_pw.shape == (N, HW, HW, C_OUT), y_pw.shape
    assert y_fused.shape == (N, HW, HW, C_OUT), y_fused.shape
    assert y_dw_generic.shape == (N, HW, HW, C_IN), y_dw_generic.shape
    assert out_nchw.shape == (N, C_OUT, HW, HW), out_nchw.shape

    # Cross-check against a pure-JAX reference of the same folded-BN math.
    y_dw_ref = _ref_dw_block(x, params["dw_w"], params["dw_bn"],
                             stride=1, padding=1)
    y_pw_ref = _ref_pw_block(y_dw_ref.astype(jnp.bfloat16),
                             params["pw_w"], params["pw_bn"])
    tol = dict(rtol=3e-2, atol=3e-2)
    assert bool(jnp.allclose(y_dw.astype(jnp.float32), y_dw_ref, **tol)), \
        "depthwise ConvBlock mismatch"
    assert bool(jnp.allclose(y_dw_generic.astype(jnp.float32), y_dw_ref, **tol)), \
        "depthwise ConvBlock (generic path) mismatch"
    assert bool(jnp.allclose(y_pw.astype(jnp.float32), y_pw_ref, **tol)), \
        "pointwise ConvBlock mismatch"
    assert bool(jnp.allclose(y_fused.astype(jnp.float32),
                             y_pw.astype(jnp.float32), **tol)), \
        "fused dws mismatch"

    print("KERNEL_OK")
</pallas_src>

<mosaic_0001>
module attributes {stable_mosaic.version = 11 : i64} {
  func.func @_dw_kernel_nhwc(%arg0: i32, %arg1: i32, %arg2: memref<1x16x16x8xbf16, #tpu.memory_space<vmem>>, %arg3: memref<3x3x8xf32, #tpu.memory_space<vmem>>, %arg4: memref<1x8xf32, #tpu.memory_space<vmem>>, %arg5: memref<1x8x16x8xbf16, #tpu.memory_space<vmem>>, %arg6: memref<18x18x8xbf16, #tpu.memory_space<vmem>>) attributes {dimension_semantics = [#tpu.dimension_semantics<parallel>, #tpu.dimension_semantics<arbitrary>], iteration_bounds = array<i64: 2, 2>, scalar_prefetch = 0 : i64, scratch_operands = 1 : i64, tpu.core_type = #tpu.core_type<tc>, window_params = [{transform_indices = @transform_0, window_bounds = array<i64: 1, 16, 16, 8>}, {pipeline_mode = #tpu.pipeline_mode<synchronous>, transform_indices = @transform_1, window_bounds = array<i64: 3, 3, 8>}, {pipeline_mode = #tpu.pipeline_mode<synchronous>, transform_indices = @transform_2, window_bounds = array<i64: 1, 8>}, {transform_indices = @transform_3, window_bounds = array<i64: 1, 8, 16, 8>}]} {
    %c0_i32 = arith.constant 0 : i32
    %0 = arith.cmpi eq, %arg1, %c0_i32 : i32
    %1 = arith.extui %0 : i1 to i32
    %c0_i32_0 = arith.constant 0 : i32
    %2 = arith.cmpi ne, %1, %c0_i32_0 : i32
    scf.if %2 {
      %cst_41 = arith.constant 0.000000e+00 : bf16
      %99 = vector.broadcast %cst_41 : bf16 to vector<1x18x8xbf16>
      %c0_42 = arith.constant 0 : index
      %c0_43 = arith.constant 0 : index
      %c0_44 = arith.constant 0 : index
      %100 = vector.load %arg6[%c0_42, %c0_43, %c0_44] : memref<18x18x8xbf16, #tpu.memory_space<vmem>>, vector<1x18x8xbf16>
      tpu.vector_store %arg6[%c0_42, %c0_43, %c0_44], %99 {strides = array<i32>} : memref<18x18x8xbf16, #tpu.memory_space<vmem>>, vector<1x18x8xbf16>,
      %cst_45 = arith.constant 0.000000e+00 : bf16
      %101 = vector.broadcast %cst_45 : bf16 to vector<16x1x8xbf16>
      %c1_46 = arith.constant 1 : index
      %c0_47 = arith.constant 0 : index
      %c0_48 = arith.constant 0 : index
      %102 = vector.load %arg6[%c1_46, %c0_47, %c0_48] : memref<18x18x8xbf16, #tpu.memory_space<vmem>>, vector<16x1x8xbf16>
      tpu.vector_store %arg6[%c1_46, %c0_47, %c0_48], %101 {strides = array<i32>} : memref<18x18x8xbf16, #tpu.memory_space<vmem>>, vector<16x1x8xbf16>,
      %cst_49 = arith.constant 0.000000e+00 : bf16
      %103 = vector.broadcast %cst_49 : bf16 to vector<16x1x8xbf16>
      %c1_50 = arith.constant 1 : index
      %c17 = arith.constant 17 : index
      %c0_51 = arith.constant 0 : index
      %104 = vector.load %arg6[%c1_50, %c17, %c0_51] : memref<18x18x8xbf16, #tpu.memory_space<vmem>>, vector<16x1x8xbf16>
      tpu.vector_store %arg6[%c1_50, %c17, %c0_51], %103 {strides = array<i32>} : memref<18x18x8xbf16, #tpu.memory_space<vmem>>, vector<16x1x8xbf16>,
      %cst_52 = arith.constant 0.000000e+00 : bf16
      %105 = vector.broadcast %cst_52 : bf16 to vector<1x18x8xbf16>
      %c17_53 = arith.constant 17 : index
      %c0_54 = arith.constant 0 : index
      %c0_55 = arith.constant 0 : index
      %106 = vector.load %arg6[%c17_53, %c0_54, %c0_55] : memref<18x18x8xbf16, #tpu.memory_space<vmem>>, vector<1x18x8xbf16>
      tpu.vector_store %arg6[%c17_53, %c0_54, %c0_55], %105 {strides = array<i32>} : memref<18x18x8xbf16, #tpu.memory_space<vmem>>, vector<1x18x8xbf16>,
      %c0_56 = arith.constant 0 : index
      %c0_57 = arith.constant 0 : index
      %c0_58 = arith.constant 0 : index
      %c0_59 = arith.constant 0 : index
      %107 = vector.load %arg2[%c0_56, %c0_57, %c0_58, %c0_59] : memref<1x16x16x8xbf16, #tpu.memory_space<vmem>>, vector<1x16x16x8xbf16>
      %108 = vector.shape_cast %107 : vector<1x16x16x8xbf16> to vector<16x16x8xbf16>
      %c1_60 = arith.constant 1 : index
      %c1_61 = arith.constant 1 : index
      %c0_62 = arith.constant 0 : index
      %109 = vector.load %arg6[%c1_60, %c1_61, %c0_62] : memref<18x18x8xbf16, #tpu.memory_space<vmem>>, vector<16x16x8xbf16>
      tpu.vector_store %arg6[%c1_60, %c1_61, %c0_62], %108 {strides = array<i32>} : memref<18x18x8xbf16, #tpu.memory_space<vmem>>, vector<16x16x8xbf16>,
    } else {
    }
    %c8_i32 = arith.constant 8 : i32
    %3 = arith.muli %arg1, %c8_i32 : i32
    %c0_i32_1 = arith.constant 0 : i32
    %4 = arith.addi %3, %c0_i32_1 : i32
    %c1_i32 = arith.constant 1 : i32
    %5 = arith.muli %4, %c1_i32 : i32
    %cst = arith.constant 0.000000e+00 : f32
    %6 = vector.broadcast %cst : f32 to vector<8x16x8xf32>
    %c0_i32_2 = arith.constant 0 : i32
    %7 = arith.addi %5, %c0_i32_2 : i32
    %8 = arith.index_cast %7 : i32 to index
    %c0 = arith.constant 0 : index
    %c0_3 = arith.constant 0 : index
    %9 = vector.load %arg6[%8, %c0, %c0_3] : memref<18x18x8xbf16, #tpu.memory_space<vmem>>, vector<8x18x8xbf16>
    %10 = vector.extract_strided_slice %9 {offsets = [0, 0, 0], sizes = [8, 16, 8], strides = [1, 1, 1]} : vector<8x18x8xbf16> to vector<8x16x8xbf16>
    %11 = arith.extf %10 : vector<8x16x8xbf16> to vector<8x16x8xf32>
    %c0_4 = arith.constant 0 : index
    %c0_5 = arith.constant 0 : index
    %c0_6 = arith.constant 0 : index
    %12 = vector.load %arg3[%c0_4, %c0_5, %c0_6] : memref<3x3x8xf32, #tpu.memory_space<vmem>>, vector<1x1x8xf32>
    %13 = vector.shape_cast %12 : vector<1x1x8xf32> to vector<8xf32>
    %14 = vector.shape_cast %13 : vector<8xf32> to vector<1x1x8xf32>
    %15 = vector.broadcast %14 : vector<1x1x8xf32> to vector<8x16x8xf32>
    %16 = arith.mulf %11, %15 : vector<8x16x8xf32>
    %17 = arith.addf %6, %16 : vector<8x16x8xf32>
    %18 = vector.extract_strided_slice %9 {offsets = [0, 1, 0], sizes = [8, 16, 8], strides = [1, 1, 1]} : vector<8x18x8xbf16> to vector<8x16x8xbf16>
    %19 = arith.extf %18 : vector<8x16x8xbf16> to vector<8x16x8xf32>
    %c0_7 = arith.constant 0 : index
    %c1 = arith.constant 1 : index
    %c0_8 = arith.constant 0 : index
    %20 = vector.load %arg3[%c0_7, %c1, %c0_8] : memref<3x3x8xf32, #tpu.memory_space<vmem>>, vector<1x1x8xf32>
    %21 = vector.shape_cast %20 : vector<1x1x8xf32> to vector<8xf32>
    %22 = vector.shape_cast %21 : vector<8xf32> to vector<1x1x8xf32>
    %23 = vector.broadcast %22 : vector<1x1x8xf32> to vector<8x16x8xf32>
    %24 = arith.mulf %19, %23 : vector<8x16x8xf32>
    %25 = arith.addf %17, %24 : vector<8x16x8xf32>
    %26 = vector.extract_strided_slice %9 {offsets = [0, 2, 0], sizes = [8, 16, 8], strides = [1, 1, 1]} : vector<8x18x8xbf16> to vector<8x16x8xbf16>
    %27 = arith.extf %26 : vector<8x16x8xbf16> to vector<8x16x8xf32>
    %c0_9 = arith.constant 0 : index
    %c2 = arith.constant 2 : index
    %c0_10 = arith.constant 0 : index
    %28 = vector.load %arg3[%c0_9, %c2, %c0_10] : memref<3x3x8xf32, #tpu.memory_space<vmem>>, vector<1x1x8xf32>
    %29 = vector.shape_cast %28 : vector<1x1x8xf32> to vector<8xf32>
    %30 = vector.shape_cast %29 : vector<8xf32> to vector<1x1x8xf32>
    %31 = vector.broadcast %30 : vector<1x1x8xf32> to vector<8x16x8xf32>
    %32 = arith.mulf %27, %31 : vector<8x16x8xf32>
    %33 = arith.addf %25, %32 : vector<8x16x8xf32>
    %c1_i32_11 = arith.constant 1 : i32
    %34 = arith.addi %5, %c1_i32_11 : i32
    %35 = arith.index_cast %34 : i32 to index
    %c0_12 = arith.constant 0 : index
    %c0_13 = arith.constant 0 : index
    %36 = vector.load %arg6[%35, %c0_12, %c0_13] : memref<18x18x8xbf16, #tpu.memory_space<vmem>>, vector<8x18x8xbf16>
    %37 = vector.extract_strided_slice %36 {offsets = [0, 0, 0], sizes = [8, 16, 8], strides = [1, 1, 1]} : vector<8x18x8xbf16> to vector<8x16x8xbf16>
    %38 = arith.extf %37 : vector<8x16x8xbf16> to vector<8x16x8xf32>
    %c1_14 = arith.constant 1 : index
    %c0_15 = arith.constant 0 : index
    %c0_16 = arith.constant 0 : index
    %39 = vector.load %arg3[%c1_14, %c0_15, %c0_16] : memref<3x3x8xf32, #tpu.memory_space<vmem>>, vector<1x1x8xf32>
    %40 = vector.shape_cast %39 : vector<1x1x8xf32> to vector<8xf32>
    %41 = vector.shape_cast %40 : vector<8xf32> to vector<1x1x8xf32>
    %42 = vector.broadcast %41 : vector<1x1x8xf32> to vector<8x16x8xf32>
    %43 = arith.mulf %38, %42 : vector<8x16x8xf32>
    %44 = arith.addf %33, %43 : vector<8x16x8xf32>
    %45 = vector.extract_strided_slice %36 {offsets = [0, 1, 0], sizes = [8, 16, 8], strides = [1, 1, 1]} : vector<8x18x8xbf16> to vector<8x16x8xbf16>
    %46 = arith.extf %45 : vector<8x16x8xbf16> to vector<8x16x8xf32>
    %c1_17 = arith.constant 1 : index
    %c1_18 = arith.constant 1 : index
    %c0_19 = arith.constant 0 : index
    %47 = vector.load %arg3[%c1_17, %c1_18, %c0_19] : memref<3x3x8xf32, #tpu.memory_space<vmem>>, vector<1x1x8xf32>
    %48 = vector.shape_cast %47 : vector<1x1x8xf32> to vector<8xf32>
    %49 = vector.shape_cast %48 : vector<8xf32> to vector<1x1x8xf32>
    %50 = vector.broadcast %49 : vector<1x1x8xf32> to vector<8x16x8xf32>
    %51 = arith.mulf %46, %50 : vector<8x16x8xf32>
    %52 = arith.addf %44, %51 : vector<8x16x8xf32>
    %53 = vector.extract_strided_slice %36 {offsets = [0, 2, 0], sizes = [8, 16, 8], strides = [1, 1, 1]} : vector<8x18x8xbf16> to vector<8x16x8xbf16>
    %54 = arith.extf %53 : vector<8x16x8xbf16> to vector<8x16x8xf32>
    %c1_20 = arith.constant 1 : index
    %c2_21 = arith.constant 2 : index
    %c0_22 = arith.constant 0 : index
    %55 = vector.load %arg3[%c1_20, %c2_21, %c0_22] : memref<3x3x8xf32, #tpu.memory_space<vmem>>, vector<1x1x8xf32>
    %56 = vector.shape_cast %55 : vector<1x1x8xf32> to vector<8xf32>
    %57 = vector.shape_cast %56 : vector<8xf32> to vector<1x1x8xf32>
    %58 = vector.broadcast %57 : vector<1x1x8xf32> to vector<8x16x8xf32>
    %59 = arith.mulf %54, %58 : vector<8x16x8xf32>
    %60 = arith.addf %52, %59 : vector<8x16x8xf32>
    %c2_i32 = arith.constant 2 : i32
    %61 = arith.addi %5, %c2_i32 : i32
    %62 = arith.index_cast %61 : i32 to index
    %c0_23 = arith.constant 0 : index
    %c0_24 = arith.constant 0 : index
    %63 = vector.load %arg6[%62, %c0_23, %c0_24] : memref<18x18x8xbf16, #tpu.memory_space<vmem>>, vector<8x18x8xbf16>
    %64 = vector.extract_strided_slice %63 {offsets = [0, 0, 0], sizes = [8, 16, 8], strides = [1, 1, 1]} : vector<8x18x8xbf16> to vector<8x16x8xbf16>
    %65 = arith.extf %64 : vector<8x16x8xbf16> to vector<8x16x8xf32>
    %c2_25 = arith.constant 2 : index
    %c0_26 = arith.constant 0 : index
    %c0_27 = arith.constant 0 : index
    %66 = vector.load %arg3[%c2_25, %c0_26, %c0_27] : memref<3x3x8xf32, #tpu.memory_space<vmem>>, vector<1x1x8xf32>
    %67 = vector.shape_cast %66 : vector<1x1x8xf32> to vector<8xf32>
    %68 = vector.shape_cast %67 : vector<8xf32> to vector<1x1x8xf32>
    %69 = vector.broadcast %68 : vector<1x1x8xf32> to vector<8x16x8xf32>
    %70 = arith.mulf %65, %69 : vector<8x16x8xf32>
    %71 = arith.addf %60, %70 : vector<8x16x8xf32>
    %72 = vector.extract_strided_slice %63 {offsets = [0, 1, 0], sizes = [8, 16, 8], strides = [1, 1, 1]} : vector<8x18x8xbf16> to vector<8x16x8xbf16>
    %73 = arith.extf %72 : vector<8x16x8xbf16> to vector<8x16x8xf32>
    %c2_28 = arith.constant 2 : index
    %c1_29 = arith.constant 1 : index
    %c0_30 = arith.constant 0 : index
    %74 = vector.load %arg3[%c2_28, %c1_29, %c0_30] : memref<3x3x8xf32, #tpu.memory_space<vmem>>, vector<1x1x8xf32>
    %75 = vector.shape_cast %74 : vector<1x1x8xf32> to vector<8xf32>
    %76 = vector.shape_cast %75 : vector<8xf32> to vector<1x1x8xf32>
    %77 = vector.broadcast %76 : vector<1x1x8xf32> to vector<8x16x8xf32>
    %78 = arith.mulf %73, %77 : vector<8x16x8xf32>
    %79 = arith.addf %71, %78 : vector<8x16x8xf32>
    %80 = vector.extract_strided_slice %63 {offsets = [0, 2, 0], sizes = [8, 16, 8], strides = [1, 1, 1]} : vector<8x18x8xbf16> to vector<8x16x8xbf16>
    %81 = arith.extf %80 : vector<8x16x8xbf16> to vector<8x16x8xf32>
    %c2_31 = arith.constant 2 : index
    %c2_32 = arith.constant 2 : index
    %c0_33 = arith.constant 0 : index
    %82 = vector.load %arg3[%c2_31, %c2_32, %c0_33] : memref<3x3x8xf32, #tpu.memory_space<vmem>>, vector<1x1x8xf32>
    %83 = vector.shape_cast %82 : vector<1x1x8xf32> to vector<8xf32>
    %84 = vector.shape_cast %83 : vector<8xf32> to vector<1x1x8xf32>
    %85 = vector.broadcast %84 : vector<1x1x8xf32> to vector<8x16x8xf32>
    %86 = arith.mulf %81, %85 : vector<8x16x8xf32>
    %87 = arith.addf %79, %86 : vector<8x16x8xf32>
    %c0_34 = arith.constant 0 : index
    %c0_35 = arith.constant 0 : index
    %88 = vector.load %arg4[%c0_34, %c0_35] : memref<1x8xf32, #tpu.memory_space<vmem>>, vector<1x8xf32>
    %89 = vector.shape_cast %88 : vector<1x8xf32> to vector<8xf32>
    %90 = vector.shape_cast %89 : vector<8xf32> to vector<1x1x8xf32>
    %91 = vector.broadcast %90 : vector<1x1x8xf32> to vector<8x16x8xf32>
    %92 = arith.addf %87, %91 : vector<8x16x8xf32>
    %cst_36 = arith.constant 0.000000e+00 : f32
    %93 = vector.broadcast %cst_36 : f32 to vector<8x16x8xf32>
    %94 = arith.maximumf %92, %93 : vector<8x16x8xf32>
    %95 = arith.truncf %94 : vector<8x16x8xf32> to vector<8x16x8xbf16>
    %c0_37 = arith.constant 0 : index
    %c0_38 = arith.constant 0 : index
    %c0_39 = arith.constant 0 : index
    %c0_40 = arith.constant 0 : index
    %96 = vector.load %arg5[%c0_37, %c0_38, %c0_39, %c0_40] : memref<1x8x16x8xbf16, #tpu.memory_space<vmem>>, vector<1x8x16x8xbf16>
    %97 = vector.shape_cast %96 : vector<1x8x16x8xbf16> to vector<8x16x8xbf16>
    %98 = vector.shape_cast %95 : vector<8x16x8xbf16> to vector<1x8x16x8xbf16>
    tpu.vector_store %arg5[%c0_37, %c0_38, %c0_39, %c0_40], %98 {strides = array<i32>} : memref<1x8x16x8xbf16, #tpu.memory_space<vmem>>, vector<1x8x16x8xbf16>,
    return
  }
  func.func @transform_0(%arg0: i32, %arg1: i32) -> (i32, i32, i32, i32) {
    %c0_i32 = arith.constant 0 : i32
    %c0_i32_0 = arith.constant 0 : i32
    %c0_i32_1 = arith.constant 0 : i32
    %c0_i32_2 = arith.constant 0 : i32
    return %arg0, %c0_i32, %c0_i32_0, %c0_i32_1 : i32, i32, i32, i32
  }
  func.func @transform_1(%arg0: i32, %arg1: i32) -> (i32, i32, i32) {
    %c0_i32 = arith.constant 0 : i32
    %c0_i32_0 = arith.constant 0 : i32
    %c0_i32_1 = arith.constant 0 : i32
    %c0_i32_2 = arith.constant 0 : i32
    return %c0_i32, %c0_i32_0, %c0_i32_1 : i32, i32, i32
  }
  func.func @transform_2(%arg0: i32, %arg1: i32) -> (i32, i32) {
    %c0_i32 = arith.constant 0 : i32
    %c0_i32_0 = arith.constant 0 : i32
    %c0_i32_1 = arith.constant 0 : i32
    return %c0_i32, %c0_i32_0 : i32, i32
  }
  func.func @transform_3(%arg0: i32, %arg1: i32) -> (i32, i32, i32, i32) {
    %c0_i32 = arith.constant 0 : i32
    %c0_i32_0 = arith.constant 0 : i32
    %c0_i32_1 = arith.constant 0 : i32
    return %arg0, %arg1, %c0_i32, %c0_i32_0 : i32, i32, i32, i32
  }
}

</mosaic_0001>

<llo_original>
// kernel: tpu_custom_call.1
$region0: #{tpu_custom_call.1}
  #allocation0 [shape = 'u32[]', space=smem, size = 0x4, offset = 0x4, fixed_abs, tag = 'smem constant byte address 0x4 - core index']
  #allocation1 [shape = 'u32[144,128]{1,0:T(1,128)}', space=vmem, size = 0x12000, scoped, tag = 'internal scratch']
  #allocation2 [shape = 'bf16[18,18,8]{2,1,0:T(8,128)(2,1)}', space=vmem, size = 0x1b000, scoped, tag = 'scratch operand']
  %s0 = inlined_call_operand.vmem [shape: bf16[2,16,16,8], index: 0, kind: input, shape index: {}]
  %s1 = inlined_call_operand.vmem [shape: f32[3,3,8], index: 1, kind: input, shape index: {}]
  %s2 = inlined_call_operand.vmem [shape: f32[1,8], index: 2, kind: input, shape index: {}]
  %s3 = inlined_call_operand.vmem [shape: bf16[2,16,16,8], index: 3, kind: output, shape index: {}]
  %s4 = sld [smem:[#allocation0]]
  $region49: #{tpu_custom_call.1} parent=0
    _
  %s6 = ssub.s32 1, %s4
  %s7 = scalar_select 0, %s6, %s4
  loop: start=0, step=1, limit=6
  $region2: #{tpu_custom_call.1} parent=0 // loop_pre_header
    _
  $region3: #{tpu_custom_call.1} parent=0 // loop_header
    %s9 = sphi 0, %s13
    %p10 = scmp.ge.s32.totalorder %s9, 6
    %s16 = sphi 0, %s28
    %s17 = sphi 0, %s24
    %s18 = sphi 0, %s16
    %s19 = sphi 0, %s17
    %s20 = sphi 0, %s18
    %s21 = sphi 0, %s19
    %s31 = sphi 0, %s33
    %s34 = sphi 0, %s31
    %s35 = sphi 0, %s34
    %s51 = sphi 0, %s35
    %s55 = sphi 0, %s55
    %s57 = sphi 0, %s55
    %s58 = sphi 0, %s57
    %s72 = sphi 0, %s58
    %s76 = sphi 0, %s76
    %s78 = sphi 0, %s76
    %s79 = sphi 0, %s78
    %s93 = sphi 0, %s79
    %s101 = sphi 0, %s103
    %s104 = sphi 0, %s101
    %s105 = sphi 0, %s104
    %s121 = sphi 0, %s105
  $region4: #{tpu_custom_call.1} parent=0 // loop_header_branch
    %12 = sbr.rel (%p10) target = $region8
  $region5: #{tpu_custom_call.1} parent=0 // loop_body
    %s14 = ssub.s32 %s9, 1
    %s15 = ssub.s32 %s9, 2
    %s22 = sadd.s32 1, %s17
    %p23 = scmp.ge.s32.totalorder %s22, 2
    %s24 = scalar_select %p23, 0, %s22
    %s25 = sadd.s32 1, %s16
    %s26 = scalar_select %p23, %s25, %s16
    %p27 = scmp.ge.s32.totalorder %s26, 2
    %s28 = scalar_select %p27, 0, %s26
    %s29 = ssub.s32 %s16, %s28
    %p30 = scmp.eq.s32.totalorder %s29, 0
    %s32 = sadd.s32 %s31, 1
    %s33 = scalar_select %p30, %s31, %s32
    %p36 = pneg %p30
    %p37 = scmp.eq.s32.totalorder %s9, 3
    %p38 = por %p36, %p37
    %p39 = scmp.ne.s32.totalorder %s31, %s34
    %p40 = scmp.eq.s32.totalorder %s9, 0
    %p41 = por %p39, %p40
    %p42 = scmp.ne.s32.totalorder %s31, %s34
    %p43 = scmp.eq.s32.totalorder %s14, 3
    %p44 = por %p42, %p43
    %p45 = scmp.ne.s32.totalorder %s34, %s35
    %p46 = scmp.eq.s32.totalorder %s14, 0
    %p47 = por %p45, %p46
    %p48 = scmp.ne.s32.totalorder %s34, %s35
    %p49 = scmp.eq.s32.totalorder %s15, 3
    %p50 = por %p48, %p49
    %p52 = scmp.ne.s32.totalorder %s35, %s51
    %p53 = scmp.eq.s32.totalorder %s15, 0
    %p54 = por %p52, %p53
    %s56 = sadd.s32 %s55, 1
    %p59 = scmp.eq.s32.totalorder %s9, 3
    %p60 = scmp.ne.s32.totalorder %s55, %s57
    %p61 = scmp.eq.s32.totalorder %s9, 0
    %p62 = por %p60, %p61
    %p63 = scmp.ne.s32.totalorder %s55, %s57
    %p64 = scmp.eq.s32.totalorder %s14, 3
    %p65 = por %p63, %p64
    %p66 = scmp.ne.s32.totalorder %s57, %s58
    %p67 = scmp.eq.s32.totalorder %s14, 0
    %p68 = por %p66, %p67
    %p69 = scmp.ne.s32.totalorder %s57, %s58
    %p70 = scmp.eq.s32.totalorder %s15, 3
    %p71 = por %p69, %p70
    %p73 = scmp.ne.s32.totalorder %s58, %s72
    %p74 = scmp.eq.s32.totalorder %s15, 0
    %p75 = por %p73, %p74
    %s77 = sadd.s32 %s76, 1
    %p80 = scmp.eq.s32.totalorder %s9, 3
    %p81 = scmp.ne.s32.totalorder %s76, %s78
    %p82 = scmp.eq.s32.totalorder %s9, 0
    %p83 = por %p81, %p82
    %p84 = scmp.ne.s32.totalorder %s76, %s78
    %p85 = scmp.eq.s32.totalorder %s14, 3
    %p86 = por %p84, %p85
    %p87 = scmp.ne.s32.totalorder %s78, %s79
    %p88 = scmp.eq.s32.totalorder %s14, 0
    %p89 = por %p87, %p88
    %p90 = scmp.ne.s32.totalorder %s78, %s79
    %p91 = scmp.eq.s32.totalorder %s15, 3
    %p92 = por %p90, %p91
    %p94 = scmp.ne.s32.totalorder %s79, %s93
    %p95 = scmp.eq.s32.totalorder %s15, 0
    %p96 = por %p94, %p95
    %s97 = ssub.s32 %s16, %s28
    %s98 = ssub.s32 %s17, %s24
    %s99 = sor.u32 %s97, %s98
    %p100 = scmp.eq.s32.totalorder %s99, 0
    %s102 = sadd.s32 %s101, 1
    %s103 = scalar_select %p100, %s101, %s102
    %p106 = pneg %p100
    %p107 = scmp.eq.s32.totalorder %s9, 3
    %p108 = por %p106, %p107
    %p109 = scmp.ne.s32.totalorder %s101, %s104
    %p110 = scmp.eq.s32.totalorder %s9, 0
    %p111 = por %p109, %p110
    %p112 = scmp.ne.s32.totalorder %s101, %s104
    %p113 = scmp.eq.s32.totalorder %s14, 3
    %p114 = por %p112, %p113
    %p115 = scmp.ne.s32.totalorder %s104, %s105
    %p116 = scmp.eq.s32.totalorder %s14, 0
    %p117 = por %p115, %p116
    %p118 = scmp.ne.s32.totalorder %s104, %s105
    %p119 = scmp.eq.s32.totalorder %s15, 3
    %p120 = por %p118, %p119
    %p122 = scmp.ne.s32.totalorder %s105, %s121
    %p123 = scmp.eq.s32.totalorder %s15, 0
    %p124 = por %p122, %p123
    %p125 = scmp.le.s32.totalorder 1, %s9
    %p126 = scmp.lt.s32.totalorder %s9, 5
    %p127 = pnand %p125, %p126
    %p128 = pneg %p127
    // Predicated region
    $region9: #{tpu_custom_call.1} parent=5 // pred_check
      _
    $region10: #{tpu_custom_call.1} parent=5 // pred_check_branch
      %130 = sbr.rel (%p127) target = $region12
    $region11: #{tpu_custom_call.1} parent=5 // pred_region
      %s131 = ssub.s32 %s9, 1
      // Predicated region
      $region13: #{tpu_custom_call.1} parent=11 // pred_check
        %p132 = pneg %p68
      $region14: #{tpu_custom_call.1} parent=11 // pred_check_branch
        %134 = sbr.rel (%p132) target = $region16
      $region15: #{tpu_custom_call.1} parent=11 // pred_region
        _
      $region16: #{tpu_custom_call.1} parent=11 // pred_fallthru
        _
      // Predicated region
      $region17: #{tpu_custom_call.1} parent=11 // pred_check
        %p135 = pneg %p89
      $region18: #{tpu_custom_call.1} parent=11 // pred_check_branch
        %137 = sbr.rel (%p135) target = $region20
      $region19: #{tpu_custom_call.1} parent=11 // pred_region
        _
      $region20: #{tpu_custom_call.1} parent=11 // pred_fallthru
        _
    $region12: #{tpu_custom_call.1} parent=5 // pred_fallthru
      _
    %p138 = scmp.lt.s32.totalorder %s9, 4
    // Predicated region
    $region21: #{tpu_custom_call.1} parent=5 // pred_check
      %p139 = pneg %p138
    $region22: #{tpu_custom_call.1} parent=5 // pred_check_branch
      %141 = sbr.rel (%p139) target = $region24
    $region23: #{tpu_custom_call.1} parent=5 // pred_region
      // Predicated region
      $region25: #{tpu_custom_call.1} parent=23 // pred_check
        %p142 = pneg %p41
      $region26: #{tpu_custom_call.1} parent=23 // pred_check_branch
        %144 = sbr.rel (%p142) target = $region28
      $region27: #{tpu_custom_call.1} parent=23 // pred_region
        %p145 = scmp.lt.s32.totalorder %s16, 1
        %s146 = scalar_select %p145, %s16, 1
        %s147 = smul.addr %s146, 32
        %s148 = smul.addr %s147, 4
        %s149 = scalar_lea.vmem %s0, %s148
      $region28: #{tpu_custom_call.1} parent=23 // pred_fallthru
        _
    $region24: #{tpu_custom_call.1} parent=5 // pred_fallthru
      _
    %p150 = scmp.le.s32.totalorder 1, %s9
    %p151 = scmp.lt.s32.totalorder %s9, 5
    %p152 = pnand %p150, %p151
    %p153 = pneg %p152
    // Predicated region
    $region29: #{tpu_custom_call.1} parent=5 // pred_check
      _
    $region30: #{tpu_custom_call.1} parent=5 // pred_check_branch
      %155 = sbr.rel (%p152) target = $region32
    $region31: #{tpu_custom_call.1} parent=5 // pred_region
      %s156 = ssub.s32 %s9, 1
      %p157 = scmp.lt.s32.totalorder %s18, 1
      %s158 = scalar_select %p157, %s18, 1
      %s159 = smul.addr %s158, 32
      %s160 = smul.addr %s159, 4
      %s161 = scalar_lea.vmem %s0, %s160
      %p162 = pneg %p47
      %p163 = pneg %p44
      %p164 = pneg %p68
      %p165 = pneg %p65
      %p166 = pneg %p89
      %p167 = pneg %p86
      %p168 = pneg %p117
      %p169 = pneg %p114
      %s170 = smul.u32 8, %s19
      %p171 = scmp.lt.s32.totalorder %s18, 1
      %s172 = scalar_select %p171, %s18, 1
      %p173 = scmp.lt.s32.totalorder %s170, 15
      %s174 = scalar_select %p173, %s170, 15
      %s175 = smul.addr %s174, 2
      %s176 = smul.addr %s172, 32
      %s177 = sadd.s32 %s175, %s176
      %s178 = smul.addr %s177, 4
      %s179 = scalar_lea.vmem %s3, %s178
      %p180 = scmp.lt.s32.totalorder %s18, 1
      %s181 = scalar_select %p180, %s18, 1
      %s182 = smul.addr %s181, 32
      %s183 = smul.addr %s182, 4
      %s184 = scalar_lea.vmem %s0, %s183
      %s185 = smul.u32 8, %s19
      %p186 = scmp.lt.s32.totalorder %s18, 1
      %s187 = scalar_select %p186, %s18, 1
      %p188 = scmp.lt.s32.totalorder %s185, 15
      %s189 = scalar_select %p188, %s185, 15
      %s190 = smul.addr %s189, 2
      %s191 = smul.addr %s187, 32
      %s192 = sadd.s32 %s190, %s191
      %s193 = smul.addr %s192, 4
      %s194 = scalar_lea.vmem %s3, %s193
      %s195 = smul.u32 8, %s19
      %p197 = scmp.eq.s32.totalorder %s19, 0
      // Predicated region
      $region33: #{tpu_custom_call.1} parent=31 // pred_check
        %p198 = pneg %p197
      $region34: #{tpu_custom_call.1} parent=31 // pred_check_branch
        %200 = sbr.rel (%p198) target = $region36
      $region35: #{tpu_custom_call.1} parent=31 // pred_region
        %vm201 = vcmask 60416
        %202 = vst.msk [vmem:[#allocation2] sm:$0xf] %vm201, 0
        %203 = vst.msk [vmem:[#allocation2 + $0x4] sm:$0xf] %vm201, 0
        %vm204 = vcmask 57344
        %205 = vst.msk [vmem:[#allocation2 + $0x8] sm:$0x1] %vm204, 0
        %s206 = scalar_lea.vmem [#allocation2], 12
        %vm207 = vcmask 57344
        %vm208 = vsmask.f32 256
        %vm209 = vmand %vm207, %vm208
        %v210 = vld [vmem:[%s206] sm:$0x1]
        %v211 = vsel %vm209, 0, %v210
        %212 = vst [vmem:[%s206] sm:$0x1] %v211
        %v213 = vld [vmem:[%s206 + $0xc] sm:$0x1]
        %v214 = vsel %vm209, 0, %v213
        %215 = vst [vmem:[%s206 + $0xc] sm:$0x1] %v214
        %v216 = vld [vmem:[%s206 + $0x18] sm:$0x1]
        %v217 = vsel %vm209, 0, %v216
        %218 = vst [vmem:[%s206 + $0x18] sm:$0x1] %v217
        %v219 = vld [vmem:[%s206 + $0x24] sm:$0x1]
        %v220 = vsel %vm209, 0, %v219
        %221 = vst [vmem:[%s206 + $0x24] sm:$0x1] %v220
        %v222 = vld [vmem:[%s206 + $0x30] sm:$0x1]
        %v223 = vsel %vm209, 0, %v222
        %224 = vst [vmem:[%s206 + $0x30] sm:$0x1] %v223
        %v225 = vld [vmem:[%s206 + $0x3c] sm:$0x1]
        %v226 = vsel %vm209, 0, %v225
        %227 = vst [vmem:[%s206 + $0x3c] sm:$0x1] %v226
        %v228 = vld [vmem:[%s206 + $0x48] sm:$0x1]
        %v229 = vsel %vm209, 0, %v228
        %230 = vst [vmem:[%s206 + $0x48] sm:$0x1] %v229
        %v231 = vld [vmem:[%s206 + $0x54] sm:$0x1]
        %v232 = vsel %vm209, 0, %v231
        %233 = vst [vmem:[%s206 + $0x54] sm:$0x1] %v232
        %v234 = vld [vmem:[%s206 + $0x60] sm:$0x1]
        %v235 = vsel %vm209, 0, %v234
        %236 = vst [vmem:[%s206 + $0x60] sm:$0x1] %v235
        %v237 = vld [vmem:[%s206 + $0x6c] sm:$0x1]
        %v238 = vsel %vm209, 0, %v237
        %239 = vst [vmem:[%s206 + $0x6c] sm:$0x1] %v238
        %v240 = vld [vmem:[%s206 + $0x78] sm:$0x1]
        %v241 = vsel %vm209, 0, %v240
        %242 = vst [vmem:[%s206 + $0x78] sm:$0x1] %v241
        %v243 = vld [vmem:[%s206 + $0x84] sm:$0x1]
        %v244 = vsel %vm209, 0, %v243
        %245 = vst [vmem:[%s206 + $0x84] sm:$0x1] %v244
        %v246 = vld [vmem:[%s206 + $0x90] sm:$0x1]
        %v247 = vsel %vm209, 0, %v246
        %248 = vst [vmem:[%s206 + $0x90] sm:$0x1] %v247
        %v249 = vld [vmem:[%s206 + $0x9c] sm:$0x1]
        %v250 = vsel %vm209, 0, %v249
        %251 = vst [vmem:[%s206 + $0x9c] sm:$0x1] %v250
        %v252 = vld [vmem:[%s206 + $0xa8] sm:$0x1]
        %v253 = vsel %vm209, 0, %v252
        %254 = vst [vmem:[%s206 + $0xa8] sm:$0x1] %v253
        %v255 = vld [vmem:[%s206 + $0xb4] sm:$0x1]
        %v256 = vsel %vm209, 0, %v255
        %257 = vst [vmem:[%s206 + $0xb4] sm:$0x1] %v256
        %vm258 = vsmask.f32 7938
        %vm259 = vmand %vm207, %vm258
        %v260 = vld [vmem:[%s206 + $0x8] sm:$0x1]
        %v261 = vsel %vm259, 0, %v260
        %262 = vst [vmem:[%s206 + $0x8] sm:$0x1] %v261
        %v263 = vld [vmem:[%s206 + $0x14] sm:$0x1]
        %v264 = vsel %vm259, 0, %v263
        %265 = vst [vmem:[%s206 + $0x14] sm:$0x1] %v264
        %v266 = vld [vmem:[%s206 + $0x20] sm:$0x1]
        %v267 = vsel %vm259, 0, %v266
        %268 = vst [vmem:[%s206 + $0x20] sm:$0x1] %v267
        %v269 = vld [vmem:[%s206 + $0x2c] sm:$0x1]
        %v270 = vsel %vm259, 0, %v269
        %271 = vst [vmem:[%s206 + $0x2c] sm:$0x1] %v270
        %v272 = vld [vmem:[%s206 + $0x38] sm:$0x1]
        %v273 = vsel %vm259, 0, %v272
        %274 = vst [vmem:[%s206 + $0x38] sm:$0x1] %v273
        %v275 = vld [vmem:[%s206 + $0x44] sm:$0x1]
        %v276 = vsel %vm259, 0, %v275
        %277 = vst [vmem:[%s206 + $0x44] sm:$0x1] %v276
        %v278 = vld [vmem:[%s206 + $0x50] sm:$0x1]
        %v279 = vsel %vm259, 0, %v278
        %280 = vst [vmem:[%s206 + $0x50] sm:$0x1] %v279
        %v281 = vld [vmem:[%s206 + $0x5c] sm:$0x1]
        %v282 = vsel %vm259, 0, %v281
        %283 = vst [vmem:[%s206 + $0x5c] sm:$0x1] %v282
        %v284 = vld [vmem:[%s206 + $0x68] sm:$0x1]
        %v285 = vsel %vm259, 0, %v284
        %286 = vst [vmem:[%s206 + $0x68] sm:$0x1] %v285
        %v287 = vld [vmem:[%s206 + $0x74] sm:$0x1]
        %v288 = vsel %vm259, 0, %v287
        %289 = vst [vmem:[%s206 + $0x74] sm:$0x1] %v288
        %v290 = vld [vmem:[%s206 + $0x80] sm:$0x1]
        %v291 = vsel %vm259, 0, %v290
        %292 = vst [vmem:[%s206 + $0x80] sm:$0x1] %v291
        %v293 = vld [vmem:[%s206 + $0x8c] sm:$0x1]
        %v294 = vsel %vm259, 0, %v293
        %295 = vst [vmem:[%s206 + $0x8c] sm:$0x1] %v294
        %v296 = vld [vmem:[%s206 + $0x98] sm:$0x1]
        %v297 = vsel %vm259, 0, %v296
        %298 = vst [vmem:[%s206 + $0x98] sm:$0x1] %v297
        %v299 = vld [vmem:[%s206 + $0xa4] sm:$0x1]
        %v300 = vsel %vm259, 0, %v299
        %301 = vst [vmem:[%s206 + $0xa4] sm:$0x1] %v300
        %v302 = vld [vmem:[%s206 + $0xb0] sm:$0x1]
        %v303 = vsel %vm259, 0, %v302
        %304 = vst [vmem:[%s206 + $0xb0] sm:$0x1] %v303
        %v305 = vld [vmem:[%s206 + $0xbc] sm:$0x1]
        %v306 = vsel %vm259, 0, %v305
        %307 = vst [vmem:[%s206 + $0xbc] sm:$0x1] %v306
        %s308 = scalar_lea.vmem [#allocation2], 204
        %309 = vst.msk [vmem:[%s308] sm:$0xf] %vm201, 0
        %310 = vst.msk [vmem:[%s308 + $0x4] sm:$0xf] %vm201, 0
        %311 = vst.msk [vmem:[%s308 + $0x8] sm:$0x1] %vm204, 0
        %v312 = vld [vmem:[%s184] sm:$0xf]
        %v313 = vld [vmem:[%s184 + $0x4] sm:$0xf]
        %v314 = vld [vmem:[%s184 + $0x8] sm:$0xf]
        %v315 = vld [vmem:[%s184 + $0xc] sm:$0xf]
        %v316 = vld [vmem:[%s184 + $0x10] sm:$0xf]
        %v317 = vld [vmem:[%s184 + $0x14] sm:$0xf]
        %v318 = vld [vmem:[%s184 + $0x18] sm:$0xf]
        %v319 = vld [vmem:[%s184 + $0x1c] sm:$0xf]
        %v320 = vld [vmem:[%s184 + $0x20] sm:$0xf]
        %v321 = vld [vmem:[%s184 + $0x24] sm:$0xf]
        %v322 = vld [vmem:[%s184 + $0x28] sm:$0xf]
        %v323 = vld [vmem:[%s184 + $0x2c] sm:$0xf]
        %v324 = vld [vmem:[%s184 + $0x30] sm:$0xf]
        %v325 = vld [vmem:[%s184 + $0x34] sm:$0xf]
        %v326 = vld [vmem:[%s184 + $0x38] sm:$0xf]
        %v327 = vld [vmem:[%s184 + $0x3c] sm:$0xf]
        %v328 = vld [vmem:[%s184 + $0x40] sm:$0xf]
        %v329 = vld [vmem:[%s184 + $0x44] sm:$0xf]
        %v330 = vld [vmem:[%s184 + $0x48] sm:$0xf]
        %v331 = vld [vmem:[%s184 + $0x4c] sm:$0xf]
        %v332 = vld [vmem:[%s184 + $0x50] sm:$0xf]
        %v333 = vld [vmem:[%s184 + $0x54] sm:$0xf]
        %v334 = vld [vmem:[%s184 + $0x58] sm:$0xf]
        %v335 = vld [vmem:[%s184 + $0x5c] sm:$0xf]
        %v336 = vld [vmem:[%s184 + $0x60] sm:$0xf]
        %v337 = vld [vmem:[%s184 + $0x64] sm:$0xf]
        %v338 = vld [vmem:[%s184 + $0x68] sm:$0xf]
        %v339 = vld [vmem:[%s184 + $0x6c] sm:$0xf]
        %v340 = vld [vmem:[%s184 + $0x70] sm:$0xf]
        %v341 = vld [vmem:[%s184 + $0x74] sm:$0xf]
        %v342 = vld [vmem:[%s184 + $0x78] sm:$0xf]
        %v343 = vld [vmem:[%s184 + $0x7c] sm:$0xf]
        %vm344 = vsmask.f32 4368
        %vm345 = vmor %vm208, %vm344
        %v347 = vshrl.u32 %v312, 16
        %v349 = vrot.slane %v347, 7
        %v350 = vshll.u32 %v312, 16
        %v352 = vor.u32 %v349, %v350
        %v353 = vrot.slane %v349, 4
        %v355 = vshrl.u32 %v313, 16
        %v357 = vrot.slane %v355, 7
        %v358 = vshll.u32 %v313, 16
        %v360 = vor.u32 %v357, %v358
        %v361 = vsel %vm345, %v353, %v360
        %v362 = vrot.slane %v357, 4
        %v364 = vshrl.u32 %v314, 16
        %v366 = vrot.slane %v364, 7
        %v367 = vshll.u32 %v314, 16
        %v369 = vor.u32 %v366, %v367
        %v370 = vrot.slane %v366, 4
        %v372 = vshrl.u32 %v315, 16
        %v374 = vrot.slane %v372, 7
        %v375 = vshll.u32 %v315, 16
        %v377 = vor.u32 %v374, %v375
        %v378 = vsel %vm345, %v370, %v377
        %v379 = vrot.slane %v374, 4
        %v381 = vshrl.u32 %v316, 16
        %v383 = vrot.slane %v381, 7
        %v384 = vshll.u32 %v316, 16
        %v386 = vor.u32 %v383, %v384
        %v387 = vrot.slane %v383, 4
        %v389 = vshrl.u32 %v317, 16
        %v391 = vrot.slane %v389, 7
        %v392 = vshll.u32 %v317, 16
        %v394 = vor.u32 %v391, %v392
        %v395 = vsel %vm345, %v387, %v394
        %v396 = vrot.slane %v391, 4
        %v398 = vshrl.u32 %v318, 16
        %v400 = vrot.slane %v398, 7
        %v401 = vshll.u32 %v318, 16
        %v403 = vor.u32 %v400, %v401
        %v404 = vrot.slane %v400, 4
        %v406 = vshrl.u32 %v319, 16
        %v408 = vrot.slane %v406, 7
        %v409 = vshll.u32 %v319, 16
        %v411 = vor.u32 %v408, %v409
        %v412 = vsel %vm345, %v404, %v411
        %v413 = vrot.slane %v408, 4
        %v415 = vshrl.u32 %v320, 16
        %v417 = vrot.slane %v415, 7
        %v418 = vshll.u32 %v320, 16
        %v420 = vor.u32 %v417, %v418
        %v421 = vrot.slane %v417, 4
        %v423 = vshrl.u32 %v321, 16
        %v425 = vrot.slane %v423, 7
        %v426 = vshll.u32 %v321, 16
        %v428 = vor.u32 %v425, %v426
        %v429 = vsel %vm345, %v421, %v428
        %v430 = vrot.slane %v425, 4
        %v432 = vshrl.u32 %v322, 16
        %v434 = vrot.slane %v432, 7
        %v435 = vshll.u32 %v322, 16
        %v437 = vor.u32 %v434, %v435
        %v438 = vrot.slane %v434, 4
        %v440 = vshrl.u32 %v323, 16
        %v442 = vrot.slane %v440, 7
        %v443 = vshll.u32 %v323, 16
        %v445 = vor.u32 %v442, %v443
        %v446 = vsel %vm345, %v438, %v445
        %v447 = vrot.slane %v442, 4
        %v449 = vshrl.u32 %v324, 16
        %v451 = vrot.slane %v449, 7
        %v452 = vshll.u32 %v324, 16
        %v454 = vor.u32 %v451, %v452
        %v455 = vrot.slane %v451, 4
        %v457 = vshrl.u32 %v325, 16
        %v459 = vrot.slane %v457, 7
        %v460 = vshll.u32 %v325, 16
        %v462 = vor.u32 %v459, %v460
        %v463 = vsel %vm345, %v455, %v462
        %v464 = vrot.slane %v459, 4
        %v466 = vshrl.u32 %v326, 16
        %v468 = vrot.slane %v466, 7
        %v469 = vshll.u32 %v326, 16
        %v471 = vor.u32 %v468, %v469
        %v472 = vrot.slane %v468, 4
        %v474 = vshrl.u32 %v327, 16
        %v476 = vrot.slane %v474, 7
        %v477 = vshll.u32 %v327, 16
        %v479 = vor.u32 %v476, %v477
        %v480 = vsel %vm345, %v472, %v479
        %v481 = vrot.slane %v476, 4
        %v483 = vshrl.u32 %v328, 16
        %v485 = vrot.slane %v483, 7
        %v486 = vshll.u32 %v328, 16
        %v488 = vor.u32 %v485, %v486
        %v489 = vrot.slane %v485, 4
        %v491 = vshrl.u32 %v329, 16
        %v493 = vrot.slane %v491, 7
        %v494 = vshll.u32 %v329, 16
        %v496 = vor.u32 %v493, %v494
        %v497 = vsel %vm345, %v489, %v496
        %v498 = vrot.slane %v493, 4
        %v500 = vshrl.u32 %v330, 16
        %v502 = vrot.slane %v500, 7
        %v503 = vshll.u32 %v330, 16
        %v505 = vor.u32 %v502, %v503
        %v506 = vrot.slane %v502, 4
        %v508 = vshrl.u32 %v331, 16
        %v510 = vrot.slane %v508, 7
        %v511 = vshll.u32 %v331, 16
        %v513 = vor.u32 %v510, %v511
        %v514 = vsel %vm345, %v506, %v513
        %v515 = vrot.slane %v510, 4
        %v517 = vshrl.u32 %v332, 16
        %v519 = vrot.slane %v517, 7
        %v520 = vshll.u32 %v332, 16
        %v522 = vor.u32 %v519, %v520
        %v523 = vrot.slane %v519, 4
        %v525 = vshrl.u32 %v333, 16
        %v527 = vrot.slane %v525, 7
        %v528 = vshll.u32 %v333, 16
        %v530 = vor.u32 %v527, %v528
        %v531 = vsel %vm345, %v523, %v530
        %v532 = vrot.slane %v527, 4
        %v534 = vshrl.u32 %v334, 16
        %v536 = vrot.slane %v534, 7
        %v537 = vshll.u32 %v334, 16
        %v539 = vor.u32 %v536, %v537
        %v540 = vrot.slane %v536, 4
        %v542 = vshrl.u32 %v335, 16
        %v544 = vrot.slane %v542, 7
        %v545 = vshll.u32 %v335, 16
        %v547 = vor.u32 %v544, %v545
        %v548 = vsel %vm345, %v540, %v547
        %v549 = vrot.slane %v544, 4
        %v551 = vshrl.u32 %v336, 16
        %v553 = vrot.slane %v551, 7
        %v554 = vshll.u32 %v336, 16
        %v556 = vor.u32 %v553, %v554
        %v557 = vrot.slane %v553, 4
        %v559 = vshrl.u32 %v337, 16
        %v561 = vrot.slane %v559, 7
        %v562 = vshll.u32 %v337, 16
        %v564 = vor.u32 %v561, %v562
        %v565 = vsel %vm345, %v557, %v564
        %v566 = vrot.slane %v561, 4
        %v568 = vshrl.u32 %v338, 16
        %v570 = vrot.slane %v568, 7
        %v571 = vshll.u32 %v338, 16
        %v573 = vor.u32 %v570, %v571
        %v574 = vrot.slane %v570, 4
        %v576 = vshrl.u32 %v339, 16
        %v578 = vrot.slane %v576, 7
        %v579 = vshll.u32 %v339, 16
        %v581 = vor.u32 %v578, %v579
        %v582 = vsel %vm345, %v574, %v581
        %v583 = vrot.slane %v578, 4
        %v585 = vshrl.u32 %v340, 16
        %v587 = vrot.slane %v585, 7
        %v588 = vshll.u32 %v340, 16
        %v590 = vor.u32 %v587, %v588
        %v591 = vrot.slane %v587, 4
        %v593 = vshrl.u32 %v341, 16
        %v595 = vrot.slane %v593, 7
        %v596 = vshll.u32 %v341, 16
        %v598 = vor.u32 %v595, %v596
        %v599 = vsel %vm345, %v591, %v598
        %v600 = vrot.slane %v595, 4
        %v602 = vshrl.u32 %v342, 16
        %v604 = vrot.slane %v602, 7
        %v605 = vshll.u32 %v342, 16
        %v607 = vor.u32 %v604, %v605
        %v608 = vrot.slane %v604, 4
        %v610 = vshrl.u32 %v343, 16
        %v612 = vrot.slane %v610, 7
        %v613 = vshll.u32 %v343, 16
        %v615 = vor.u32 %v612, %v613
        %v616 = vsel %vm345, %v608, %v615
        %v617 = vrot.slane %v612, 4
        %vm666 = vcmask 60416
        %vm667 = vmand %vm666, %vm258
        %v668 = vld [vmem:[%s206] sm:$0xf]
        %v669 = vsel %vm667, %v352, %v668
        %670 = vst [vmem:[%s206] sm:$0xf] %v669
        %671 = vst.msk [vmem:[%s206 + $0x4] sm:$0xf] %vm201, %v361
        %v672 = vld [vmem:[%s206 + $0x8] sm:$0x1]
        %v673 = vsel %vm209, %v362, %v672
        %674 = vst [vmem:[%s206 + $0x8] sm:$0x1] %v673
        %v675 = vld [vmem:[%s206 + $0xc] sm:$0xf]
        %v676 = vsel %vm667, %v369, %v675
        %677 = vst [vmem:[%s206 + $0xc] sm:$0xf] %v676
        %678 = vst.msk [vmem:[%s206 + $0x10] sm:$0xf] %vm201, %v378
        %v679 = vld [vmem:[%s206 + $0x14] sm:$0x1]
        %v680 = vsel %vm209, %v379, %v679
        %681 = vst [vmem:[%s206 + $0x14] sm:$0x1] %v680
        %v682 = vld [vmem:[%s206 + $0x18] sm:$0xf]
        %v683 = vsel %vm667, %v386, %v682
        %684 = vst [vmem:[%s206 + $0x18] sm:$0xf] %v683
        %685 = vst.msk [vmem:[%s206 + $0x1c] sm:$0xf] %vm201, %v395
        %v686 = vld [vmem:[%s206 + $0x20] sm:$0x1]
        %v687 = vsel %vm209, %v396, %v686
        %688 = vst [vmem:[%s206 + $0x20] sm:$0x1] %v687
        %v689 = vld [vmem:[%s206 + $0x24] sm:$0xf]
        %v690 = vsel %vm667, %v403, %v689
        %691 = vst [vmem:[%s206 + $0x24] sm:$0xf] %v690
        %692 = vst.msk [vmem:[%s206 + $0x28] sm:$0xf] %vm201, %v412
        %v693 = vld [vmem:[%s206 + $0x2c] sm:$0x1]
        %v694 = vsel %vm209, %v413, %v693
        %695 = vst [vmem:[%s206 + $0x2c] sm:$0x1] %v694
        %v696 = vld [vmem:[%s206 + $0x30] sm:$0xf]
        %v697 = vsel %vm667, %v420, %v696
        %698 = vst [vmem:[%s206 + $0x30] sm:$0xf] %v697
        %699 = vst.msk [vmem:[%s206 + $0x34] sm:$0xf] %vm201, %v429
        %v700 = vld [vmem:[%s206 + $0x38] sm:$0x1]
        %v701 = vsel %vm209, %v430, %v700
        %702 = vst [vmem:[%s206 + $0x38] sm:$0x1] %v701
        %v703 = vld [vmem:[%s206 + $0x3c] sm:$0xf]
        %v704 = vsel %vm667, %v437, %v703
        %705 = vst [vmem:[%s206 + $0x3c] sm:$0xf] %v704
        %706 = vst.msk [vmem:[%s206 + $0x40] sm:$0xf] %vm201, %v446
        %v707 = vld [vmem:[%s206 + $0x44] sm:$0x1]
        %v708 = vsel %vm209, %v447, %v707
        %709 = vst [vmem:[%s206 + $0x44] sm:$0x1] %v708
        %v710 = vld [vmem:[%s206 + $0x48] sm:$0xf]
        %v711 = vsel %vm667, %v454, %v710
        %712 = vst [vmem:[%s206 + $0x48] sm:$0xf] %v711
        %713 = vst.msk [vmem:[%s206 + $0x4c] sm:$0xf] %vm201, %v463
        %v714 = vld [vmem:[%s206 + $0x50] sm:$0x1]
        %v715 = vsel %vm209, %v464, %v714
        %716 = vst [vmem:[%s206 + $0x50] sm:$0x1] %v715
        %v717 = vld [vmem:[%s206 + $0x54] sm:$0xf]
        %v718 = vsel %vm667, %v471, %v717
        %719 = vst [vmem:[%s206 + $0x54] sm:$0xf] %v718
        %720 = vst.msk [vmem:[%s206 + $0x58] sm:$0xf] %vm201, %v480
        %v721 = vld [vmem:[%s206 + $0x5c] sm:$0x1]
        %v722 = vsel %vm209, %v481, %v721
        %723 = vst [vmem:[%s206 + $0x5c] sm:$0x1] %v722
        %v724 = vld [vmem:[%s206 + $0x60] sm:$0xf]
        %v725 = vsel %vm667, %v488, %v724
        %726 = vst [vmem:[%s206 + $0x60] sm:$0xf] %v725
        %727 = vst.msk [vmem:[%s206 + $0x64] sm:$0xf] %vm201, %v497
        %v728 = vld [vmem:[%s206 + $0x68] sm:$0x1]
        %v729 = vsel %vm209, %v498, %v728
        %730 = vst [vmem:[%s206 + $0x68] sm:$0x1] %v729
        %v731 = vld [vmem:[%s206 + $0x6c] sm:$0xf]
        %v732 = vsel %vm667, %v505, %v731
        %733 = vst [vmem:[%s206 + $0x6c] sm:$0xf] %v732
        %734 = vst.msk [vmem:[%s206 + $0x70] sm:$0xf] %vm201, %v514
        %v735 = vld [vmem:[%s206 + $0x74] sm:$0x1]
        %v736 = vsel %vm209, %v515, %v735
        %737 = vst [vmem:[%s206 + $0x74] sm:$0x1] %v736
        %v738 = vld [vmem:[%s206 + $0x78] sm:$0xf]
        %v739 = vsel %vm667, %v522, %v738
        %740 = vst [vmem:[%s206 + $0x78] sm:$0xf] %v739
        %741 = vst.msk [vmem:[%s206 + $0x7c] sm:$0xf] %vm201, %v531
        %v742 = vld [vmem:[%s206 + $0x80] sm:$0x1]
        %v743 = vsel %vm209, %v532, %v742
        %744 = vst [vmem:[%s206 + $0x80] sm:$0x1] %v743
        %v745 = vld [vmem:[%s206 + $0x84] sm:$0xf]
        %v746 = vsel %vm667, %v539, %v745
        %747 = vst [vmem:[%s206 + $0x84] sm:$0xf] %v746
        %748 = vst.msk [vmem:[%s206 + $0x88] sm:$0xf] %vm201, %v548
        %v749 = vld [vmem:[%s206 + $0x8c] sm:$0x1]
        %v750 = vsel %vm209, %v549, %v749
        %751 = vst [vmem:[%s206 + $0x8c] sm:$0x1] %v750
        %v752 = vld [vmem:[%s206 + $0x90] sm:$0xf]
        %v753 = vsel %vm667, %v556, %v752
        %754 = vst [vmem:[%s206 + $0x90] sm:$0xf] %v753
        %755 = vst.msk [vmem:[%s206 + $0x94] sm:$0xf] %vm201, %v565
        %v756 = vld [vmem:[%s206 + $0x98] sm:$0x1]
        %v757 = vsel %vm209, %v566, %v756
        %758 = vst [vmem:[%s206 + $0x98] sm:$0x1] %v757
        %v759 = vld [vmem:[%s206 + $0x9c] sm:$0xf]
        %v760 = vsel %vm667, %v573, %v759
        %761 = vst [vmem:[%s206 + $0x9c] sm:$0xf] %v760
        %762 = vst.msk [vmem:[%s206 + $0xa0] sm:$0xf] %vm201, %v582
        %v763 = vld [vmem:[%s206 + $0xa4] sm:$0x1]
        %v764 = vsel %vm209, %v583, %v763
        %765 = vst [vmem:[%s206 + $0xa4] sm:$0x1] %v764
        %v766 = vld [vmem:[%s206 + $0xa8] sm:$0xf]
        %v767 = vsel %vm667, %v590, %v766
        %768 = vst [vmem:[%s206 + $0xa8] sm:$0xf] %v767
        %769 = vst.msk [vmem:[%s206 + $0xac] sm:$0xf] %vm201, %v599
        %v770 = vld [vmem:[%s206 + $0xb0] sm:$0x1]
        %v771 = vsel %vm209, %v600, %v770
        %772 = vst [vmem:[%s206 + $0xb0] sm:$0x1] %v771
        %v773 = vld [vmem:[%s206 + $0xb4] sm:$0xf]
        %v774 = vsel %vm667, %v607, %v773
        %775 = vst [vmem:[%s206 + $0xb4] sm:$0xf] %v774
        %776 = vst.msk [vmem:[%s206 + $0xb8] sm:$0xf] %vm201, %v616
        %v777 = vld [vmem:[%s206 + $0xbc] sm:$0x1]
        %v778 = vsel %vm209, %v617, %v777
        %779 = vst [vmem:[%s206 + $0xbc] sm:$0x1] %v778
      $region36: #{tpu_custom_call.1} parent=31 // pred_fallthru
        _
      %s780 = smul.u32 %s19, 8
      %s781 = smul.u32 %s780, 3
      %s782 = smul.addr %s781, 4
      %s783 = scalar_lea.vmem [#allocation2], %s782
      %v784 = vld [vmem:[%s783] sm:$0xf]
      %v785 = vld [vmem:[%s783 + $0x4] sm:$0xf]
      %v786 = vld [vmem:[%s783 + $0x8] sm:$0x1]
      %v787 = vld [vmem:[%s783 + $0xc] sm:$0xf]
      %v788 = vld [vmem:[%s783 + $0x10] sm:$0xf]
      %v789 = vld [vmem:[%s783 + $0x14] sm:$0x1]
      %v790 = vld [vmem:[%s783 + $0x18] sm:$0xf]
      %v791 = vld [vmem:[%s783 + $0x1c] sm:$0xf]
      %v792 = vld [vmem:[%s783 + $0x20] sm:$0x1]
      %v793 = vld [vmem:[%s783 + $0x24] sm:$0xf]
      %v794 = vld [vmem:[%s783 + $0x28] sm:$0xf]
      %v795 = vld [vmem:[%s783 + $0x2c] sm:$0x1]
      %v796 = vld [vmem:[%s783 + $0x30] sm:$0xf]
      %v797 = vld [vmem:[%s783 + $0x34] sm:$0xf]
      %v798 = vld [vmem:[%s783 + $0x38] sm:$0x1]
      %v799 = vld [vmem:[%s783 + $0x3c] sm:$0xf]
      %v800 = vld [vmem:[%s783 + $0x40] sm:$0xf]
      %v801 = vld [vmem:[%s783 + $0x44] sm:$0x1]
      %v802 = vld [vmem:[%s783 + $0x48] sm:$0xf]
      %v803 = vld [vmem:[%s783 + $0x4c] sm:$0xf]
      %v804 = vld [vmem:[%s783 + $0x50] sm:$0x1]
      %v805 = vld [vmem:[%s783 + $0x54] sm:$0xf]
      %v806 = vld [vmem:[%s783 + $0x58] sm:$0xf]
      %v807 = vld [vmem:[%s783 + $0x5c] sm:$0x1]
      %v808 = vunpack.c.l.bf16 %v784
      %v809 = vunpack.c.l.bf16 %v785
      %v810 = vunpack.c.l.bf16 %v787
      %v811 = vunpack.c.l.bf16 %v788
      %v812 = vunpack.c.l.bf16 %v790
      %v813 = vunpack.c.l.bf16 %v791
      %v814 = vunpack.c.l.bf16 %v793
      %v815 = vunpack.c.l.bf16 %v794
      %v816 = vunpack.c.l.bf16 %v796
      %v817 = vunpack.c.l.bf16 %v797
      %v818 = vunpack.c.l.bf16 %v799
      %v819 = vunpack.c.l.bf16 %v800
      %v820 = vunpack.c.l.bf16 %v802
      %v821 = vunpack.c.l.bf16 %v803
      %v822 = vunpack.c.l.bf16 %v805
      %v823 = vunpack.c.l.bf16 %v806
      %v824 = vld [vmem:[%s1] sm:$0x1]
      %v825 = vlaneseq
      %v826 = vshrl.u32 %v825, 7
      %v827 = vsub.s32 0, %v826
      %v828 = vrot.slane %v824, %v827
      %v829 = vmul.f32 %v808, %v828
      %v830 = vmul.f32 %v809, %v828
      %v831 = vmul.f32 %v810, %v828
      %v832 = vmul.f32 %v811, %v828
      %v833 = vmul.f32 %v812, %v828
      %v834 = vmul.f32 %v813, %v828
      %v835 = vmul.f32 %v814, %v828
      %v836 = vmul.f32 %v815, %v828
      %v837 = vmul.f32 %v816, %v828
      %v838 = vmul.f32 %v817, %v828
      %v839 = vmul.f32 %v818, %v828
      %v840 = vmul.f32 %v819, %v828
      %v841 = vmul.f32 %v820, %v828
      %v842 = vmul.f32 %v821, %v828
      %v843 = vmul.f32 %v822, %v828
      %v844 = vmul.f32 %v823, %v828
      %v845 = vadd.f32 %v829, 0.0
      %v846 = vadd.f32 %v830, 0.0
      %v847 = vadd.f32 %v831, 0.0
      %v848 = vadd.f32 %v832, 0.0
      %v849 = vadd.f32 %v833, 0.0
      %v850 = vadd.f32 %v834, 0.0
      %v851 = vadd.f32 %v835, 0.0
      %v852 = vadd.f32 %v836, 0.0
      %v853 = vadd.f32 %v837, 0.0
      %v854 = vadd.f32 %v838, 0.0
      %v855 = vadd.f32 %v839, 0.0
      %v856 = vadd.f32 %v840, 0.0
      %v857 = vadd.f32 %v841, 0.0
      %v858 = vadd.f32 %v842, 0.0
      %v859 = vadd.f32 %v843, 0.0
      %v860 = vadd.f32 %v844, 0.0
      %v861 = vunpack.c.l.bf16 %v786
      %v862 = vunpack.c.l.bf16 %v789
      %v863 = vunpack.c.l.bf16 %v792
      %v864 = vunpack.c.l.bf16 %v795
      %v865 = vunpack.c.l.bf16 %v798
      %v866 = vunpack.c.l.bf16 %v801
      %v867 = vunpack.c.l.bf16 %v804
      %v868 = vunpack.c.l.bf16 %v807
      %v869 = vld [vmem:[%s1 + $0x1] sm:$0x1]
      %v870 = vlaneseq
      %v871 = vshrl.u32 %v870, 7
      %v872 = vsub.s32 0, %v871
      %v873 = vrot.slane %v869, %v872
      %v874 = vmul.f32 %v808, %v873
      %v875 = vmul.f32 %v809, %v873
      %v876 = vmul.f32 %v861, %v873
      %v877 = vmul.f32 %v810, %v873
      %v878 = vmul.f32 %v811, %v873
      %v879 = vmul.f32 %v862, %v873
      %v880 = vmul.f32 %v812, %v873
      %v881 = vmul.f32 %v813, %v873
      %v882 = vmul.f32 %v863, %v873
      %v883 = vmul.f32 %v814, %v873
      %v884 = vmul.f32 %v815, %v873
      %v885 = vmul.f32 %v864, %v873
      %v886 = vmul.f32 %v816, %v873
      %v887 = vmul.f32 %v817, %v873
      %v888 = vmul.f32 %v865, %v873
      %v889 = vmul.f32 %v818, %v873
      %v890 = vmul.f32 %v819, %v873
      %v891 = vmul.f32 %v866, %v873
      %v892 = vmul.f32 %v820, %v873
      %v893 = vmul.f32 %v821, %v873
      %v894 = vmul.f32 %v867, %v873
      %v895 = vmul.f32 %v822, %v873
      %v896 = vmul.f32 %v823, %v873
      %v897 = vmul.f32 %v868, %v873
      %vm922 = vcmask 1046528
      %v923 = vrot.slane %v874, 1
      %v924 = vrot.slane %v875, 1
      %v925 = vsel %vm922, %v923, %v924
      %v926 = vrot.slane %v876, 1
      %v927 = vsel %vm922, %v924, %v926
      %v928 = vrot.slane %v877, 1
      %v929 = vrot.slane %v878, 1
      %v930 = vsel %vm922, %v928, %v929
      %v931 = vrot.slane %v879, 1
      %v932 = vsel %vm922, %v929, %v931
      %v933 = vrot.slane %v880, 1
      %v934 = vrot.slane %v881, 1
      %v935 = vsel %vm922, %v933, %v934
      %v936 = vrot.slane %v882, 1
      %v937 = vsel %vm922, %v934, %v936
      %v938 = vrot.slane %v883, 1
      %v939 = vrot.slane %v884, 1
      %v940 = vsel %vm922, %v938, %v939
      %v941 = vrot.slane %v885, 1
      %v942 = vsel %vm922, %v939, %v941
      %v943 = vrot.slane %v886, 1
      %v944 = vrot.slane %v887, 1
      %v945 = vsel %vm922, %v943, %v944
      %v946 = vrot.slane %v888, 1
      %v947 = vsel %vm922, %v944, %v946
      %v948 = vrot.slane %v889, 1
      %v949 = vrot.slane %v890, 1
      %v950 = vsel %vm922, %v948, %v949
      %v951 = vrot.slane %v891, 1
      %v952 = vsel %vm922, %v949, %v951
      %v953 = vrot.slane %v892, 1
      %v954 = vrot.slane %v893, 1
      %v955 = vsel %vm922, %v953, %v954
      %v956 = vrot.slane %v894, 1
      %v957 = vsel %vm922, %v954, %v956
      %v958 = vrot.slane %v895, 1
      %v959 = vrot.slane %v896, 1
      %v960 = vsel %vm922, %v958, %v959
      %v961 = vrot.slane %v897, 1
      %v962 = vsel %vm922, %v959, %v961
      %v979 = vadd.f32 %v845, %v925
      %v980 = vadd.f32 %v846, %v927
      %v981 = vadd.f32 %v847, %v930
      %v982 = vadd.f32 %v848, %v932
      %v983 = vadd.f32 %v849, %v935
      %v984 = vadd.f32 %v850, %v937
      %v985 = vadd.f32 %v851, %v940
      %v986 = vadd.f32 %v852, %v942
      %v987 = vadd.f32 %v853, %v945
      %v988 = vadd.f32 %v854, %v947
      %v989 = vadd.f32 %v855, %v950
      %v990 = vadd.f32 %v856, %v952
      %v991 = vadd.f32 %v857, %v955
      %v992 = vadd.f32 %v858, %v957
      %v993 = vadd.f32 %v859, %v960
      %v994 = vadd.f32 %v860, %v962
      %v995 = vld [vmem:[%s1 + $0x2] sm:$0x1]
      %v996 = vlaneseq
      %v997 = vshrl.u32 %v996, 7
      %v998 = vsub.s32 0, %v997
      %v999 = vrot.slane %v995, %v998
      %v1000 = vmul.f32 %v808, %v999
      %v1001 = vmul.f32 %v809, %v999
      %v1002 = vmul.f32 %v861, %v999
      %v1003 = vmul.f32 %v810, %v999
      %v1004 = vmul.f32 %v811, %v999
      %v1005 = vmul.f32 %v862, %v999
      %v1006 = vmul.f32 %v812, %v999
      %v1007 = vmul.f32 %v813, %v999
      %v1008 = vmul.f32 %v863, %v999
      %v1009 = vmul.f32 %v814, %v999
      %v1010 = vmul.f32 %v815, %v999
      %v1011 = vmul.f32 %v864, %v999
      %v1012 = vmul.f32 %v816, %v999
      %v1013 = vmul.f32 %v817, %v999
      %v1014 = vmul.f32 %v865, %v999
      %v1015 = vmul.f32 %v818, %v999
      %v1016 = vmul.f32 %v819, %v999
      %v1017 = vmul.f32 %v866, %v999
      %v1018 = vmul.f32 %v820, %v999
      %v1019 = vmul.f32 %v821, %v999
      %v1020 = vmul.f32 %v867, %v999
      %v1021 = vmul.f32 %v822, %v999
      %v1022 = vmul.f32 %v823, %v999
      %v1023 = vmul.f32 %v868, %v999
      %vm1048 = vcmask 1045504
      %v1049 = vrot.slane %v1000, 2
      %v1050 = vrot.slane %v1001, 2
      %v1051 = vsel %vm1048, %v1049, %v1050
      %v1052 = vrot.slane %v1002, 2
      %v1053 = vsel %vm1048, %v1050, %v1052
      %v1054 = vrot.slane %v1003, 2
      %v1055 = vrot.slane %v1004, 2
      %v1056 = vsel %vm1048, %v1054, %v1055
      %v1057 = vrot.slane %v1005, 2
      %v1058 = vsel %vm1048, %v1055, %v1057
      %v1059 = vrot.slane %v1006, 2
      %v1060 = vrot.slane %v1007, 2
      %v1061 = vsel %vm1048, %v1059, %v1060
      %v1062 = vrot.slane %v1008, 2
      %v1063 = vsel %vm1048, %v1060, %v1062
      %v1064 = vrot.slane %v1009, 2
      %v1065 = vrot.slane %v1010, 2
      %v1066 = vsel %vm1048, %v1064, %v1065
      %v1067 = vrot.slane %v1011, 2
      %v1068 = vsel %vm1048, %v1065, %v1067
      %v1069 = vrot.slane %v1012, 2
      %v1070 = vrot.slane %v1013, 2
      %v1071 = vsel %vm1048, %v1069, %v1070
      %v1072 = vrot.slane %v1014, 2
      %v1073 = vsel %vm1048, %v1070, %v1072
      %v1074 = vrot.slane %v1015, 2
      %v1075 = vrot.slane %v1016, 2
      %v1076 = vsel %vm1048, %v1074, %v1075
      %v1077 = vrot.slane %v1017, 2
      %v1078 = vsel %vm1048, %v1075, %v1077
      %v1079 = vrot.slane %v1018, 2
      %v1080 = vrot.slane %v1019, 2
      %v1081 = vsel %vm1048, %v1079, %v1080
      %v1082 = vrot.slane %v1020, 2
      %v1083 = vsel %vm1048, %v1080, %v1082
      %v1084 = vrot.slane %v1021, 2
      %v1085 = vrot.slane %v1022, 2
      %v1086 = vsel %vm1048, %v1084, %v1085
      %v1087 = vrot.slane %v1023, 2
      %v1088 = vsel %vm1048, %v1085, %v1087
      %v1105 = vadd.f32 %v979, %v1051
      %v1106 = vadd.f32 %v980, %v1053
      %v1107 = vadd.f32 %v981, %v1056
      %v1108 = vadd.f32 %v982, %v1058
      %v1109 = vadd.f32 %v983, %v1061
      %v1110 = vadd.f32 %v984, %v1063
      %v1111 = vadd.f32 %v985, %v1066
      %v1112 = vadd.f32 %v986, %v1068
      %v1113 = vadd.f32 %v987, %v1071
      %v1114 = vadd.f32 %v988, %v1073
      %v1115 = vadd.f32 %v989, %v1076
      %v1116 = vadd.f32 %v990, %v1078
      %v1117 = vadd.f32 %v991, %v1081
      %v1118 = vadd.f32 %v992, %v1083
      %v1119 = vadd.f32 %v993, %v1086
      %v1120 = vadd.f32 %v994, %v1088
      %s1121 = sadd.s32 %s780, 1
      %s1122 = smul.u32 %s1121, 3
      %s1123 = smul.addr %s1122, 4
      %s1124 = scalar_lea.vmem [#allocation2], %s1123
      %v1125 = vld [vmem:[%s1124] sm:$0xf]
      %v1126 = vld [vmem:[%s1124 + $0x4] sm:$0xf]
      %v1127 = vld [vmem:[%s1124 + $0x8] sm:$0x1]
      %v1128 = vld [vmem:[%s1124 + $0xc] sm:$0xf]
      %v1129 = vld [vmem:[%s1124 + $0x10] sm:$0xf]
      %v1130 = vld [vmem:[%s1124 + $0x14] sm:$0x1]
      %v1131 = vld [vmem:[%s1124 + $0x18] sm:$0xf]
      %v1132 = vld [vmem:[%s1124 + $0x1c] sm:$0xf]
      %v1133 = vld [vmem:[%s1124 + $0x20] sm:$0x1]
      %v1134 = vld [vmem:[%s1124 + $0x24] sm:$0xf]
      %v1135 = vld [vmem:[%s1124 + $0x28] sm:$0xf]
      %v1136 = vld [vmem:[%s1124 + $0x2c] sm:$0x1]
      %v1137 = vld [vmem:[%s1124 + $0x30] sm:$0xf]
      %v1138 = vld [vmem:[%s1124 + $0x34] sm:$0xf]
      %v1139 = vld [vmem:[%s1124 + $0x38] sm:$0x1]
      %v1140 = vld [vmem:[%s1124 + $0x3c] sm:$0xf]
      %v1141 = vld [vmem:[%s1124 + $0x40] sm:$0xf]
      %v1142 = vld [vmem:[%s1124 + $0x44] sm:$0x1]
      %v1143 = vld [vmem:[%s1124 + $0x48] sm:$0xf]
      %v1144 = vld [vmem:[%s1124 + $0x4c] sm:$0xf]
      %v1145 = vld [vmem:[%s1124 + $0x50] sm:$0x1]
      %v1146 = vld [vmem:[%s1124 + $0x54] sm:$0xf]
      %v1147 = vld [vmem:[%s1124 + $0x58] sm:$0xf]
      %v1148 = vld [vmem:[%s1124 + $0x5c] sm:$0x1]
      %v1149 = vunpack.c.l.bf16 %v1125
      %v1150 = vunpack.c.l.bf16 %v1126
      %v1151 = vunpack.c.l.bf16 %v1128
      %v1152 = vunpack.c.l.bf16 %v1129
      %v1153 = vunpack.c.l.bf16 %v1131
      %v1154 = vunpack.c.l.bf16 %v1132
      %v1155 = vunpack.c.l.bf16 %v1134
      %v1156 = vunpack.c.l.bf16 %v1135
      %v1157 = vunpack.c.l.bf16 %v1137
      %v1158 = vunpack.c.l.bf16 %v1138
      %v1159 = vunpack.c.l.bf16 %v1140
      %v1160 = vunpack.c.l.bf16 %v1141
      %v1161 = vunpack.c.l.bf16 %v1143
      %v1162 = vunpack.c.l.bf16 %v1144
      %v1163 = vunpack.c.l.bf16 %v1146
      %v1164 = vunpack.c.l.bf16 %v1147
      %s1165 = scalar_lea.vmem %s1, 4
      %v1166 = vld [vmem:[%s1165] sm:$0x1]
      %v1167 = vlaneseq
      %v1168 = vshrl.u32 %v1167, 7
      %v1169 = vsub.s32 0, %v1168
      %v1170 = vrot.slane %v1166, %v1169
      %v1171 = vmul.f32 %v1149, %v1170
      %v1172 = vmul.f32 %v1150, %v1170
      %v1173 = vmul.f32 %v1151, %v1170
      %v1174 = vmul.f32 %v1152, %v1170
      %v1175 = vmul.f32 %v1153, %v1170
      %v1176 = vmul.f32 %v1154, %v1170
      %v1177 = vmul.f32 %v1155, %v1170
      %v1178 = vmul.f32 %v1156, %v1170
      %v1179 = vmul.f32 %v1157, %v1170
      %v1180 = vmul.f32 %v1158, %v1170
      %v1181 = vmul.f32 %v1159, %v1170
      %v1182 = vmul.f32 %v1160, %v1170
      %v1183 = vmul.f32 %v1161, %v1170
      %v1184 = vmul.f32 %v1162, %v1170
      %v1185 = vmul.f32 %v1163, %v1170
      %v1186 = vmul.f32 %v1164, %v1170
      %v1187 = vadd.f32 %v1105, %v1171
      %v1188 = vadd.f32 %v1106, %v1172
      %v1189 = vadd.f32 %v1107, %v1173
      %v1190 = vadd.f32 %v1108, %v1174
      %v1191 = vadd.f32 %v1109, %v1175
      %v1192 = vadd.f32 %v1110, %v1176
      %v1193 = vadd.f32 %v1111, %v1177
      %v1194 = vadd.f32 %v1112, %v1178
      %v1195 = vadd.f32 %v1113, %v1179
      %v1196 = vadd.f32 %v1114, %v1180
      %v1197 = vadd.f32 %v1115, %v1181
      %v1198 = vadd.f32 %v1116, %v1182
      %v1199 = vadd.f32 %v1117, %v1183
      %v1200 = vadd.f32 %v1118, %v1184
      %v1201 = vadd.f32 %v1119, %v1185
      %v1202 = vadd.f32 %v1120, %v1186
      %v1203 = vunpack.c.l.bf16 %v1127
      %v1204 = vunpack.c.l.bf16 %v1130
      %v1205 = vunpack.c.l.bf16 %v1133
      %v1206 = vunpack.c.l.bf16 %v1136
      %v1207 = vunpack.c.l.bf16 %v1139
      %v1208 = vunpack.c.l.bf16 %v1142
      %v1209 = vunpack.c.l.bf16 %v1145
      %v1210 = vunpack.c.l.bf16 %v1148
      %v1211 = vld [vmem:[%s1165 + $0x1] sm:$0x1]
      %v1212 = vlaneseq
      %v1213 = vshrl.u32 %v1212, 7
      %v1214 = vsub.s32 0, %v1213
      %v1215 = vrot.slane %v1211, %v1214
      %v1216 = vmul.f32 %v1149, %v1215
      %v1217 = vmul.f32 %v1150, %v1215
      %v1218 = vmul.f32 %v1203, %v1215
      %v1219 = vmul.f32 %v1151, %v1215
      %v1220 = vmul.f32 %v1152, %v1215
      %v1221 = vmul.f32 %v1204, %v1215
      %v1222 = vmul.f32 %v1153, %v1215
      %v1223 = vmul.f32 %v1154, %v1215
      %v1224 = vmul.f32 %v1205, %v1215
      %v1225 = vmul.f32 %v1155, %v1215
      %v1226 = vmul.f32 %v1156, %v1215
      %v1227 = vmul.f32 %v1206, %v1215
      %v1228 = vmul.f32 %v1157, %v1215
      %v1229 = vmul.f32 %v1158, %v1215
      %v1230 = vmul.f32 %v1207, %v1215
      %v1231 = vmul.f32 %v1159, %v1215
      %v1232 = vmul.f32 %v1160, %v1215
      %v1233 = vmul.f32 %v1208, %v1215
      %v1234 = vmul.f32 %v1161, %v1215
      %v1235 = vmul.f32 %v1162, %v1215
      %v1236 = vmul.f32 %v1209, %v1215
      %v1237 = vmul.f32 %v1163, %v1215
      %v1238 = vmul.f32 %v1164, %v1215
      %v1239 = vmul.f32 %v1210, %v1215
      %v1264 = vrot.slane %v1216, 1
      %v1265 = vrot.slane %v1217, 1
      %v1266 = vsel %vm922, %v1264, %v1265
      %v1267 = vrot.slane %v1218, 1
      %v1268 = vsel %vm922, %v1265, %v1267
      %v1269 = vrot.slane %v1219, 1
      %v1270 = vrot.slane %v1220, 1
      %v1271 = vsel %vm922, %v1269, %v1270
      %v1272 = vrot.slane %v1221, 1
      %v1273 = vsel %vm922, %v1270, %v1272
      %v1274 = vrot.slane %v1222, 1
      %v1275 = vrot.slane %v1223, 1
      %v1276 = vsel %vm922, %v1274, %v1275
      %v1277 = vrot.slane %v1224, 1
      %v1278 = vsel %vm922, %v1275, %v1277
      %v1279 = vrot.slane %v1225, 1
      %v1280 = vrot.slane %v1226, 1
      %v1281 = vsel %vm922, %v1279, %v1280
      %v1282 = vrot.slane %v1227, 1
      %v1283 = vsel %vm922, %v1280, %v1282
      %v1284 = vrot.slane %v1228, 1
      %v1285 = vrot.slane %v1229, 1
      %v1286 = vsel %vm922, %v1284, %v1285
      %v1287 = vrot.slane %v1230, 1
      %v1288 = vsel %vm922, %v1285, %v1287
      %v1289 = vrot.slane %v1231, 1
      %v1290 = vrot.slane %v1232, 1
      %v1291 = vsel %vm922, %v1289, %v1290
      %v1292 = vrot.slane %v1233, 1
      %v1293 = vsel %vm922, %v1290, %v1292
      %v1294 = vrot.slane %v1234, 1
      %v1295 = vrot.slane %v1235, 1
      %v1296 = vsel %vm922, %v1294, %v1295
      %v1297 = vrot.slane %v1236, 1
      %v1298 = vsel %vm922, %v1295, %v1297
      %v1299 = vrot.slane %v1237, 1
      %v1300 = vrot.slane %v1238, 1
      %v1301 = vsel %vm922, %v1299, %v1300
      %v1302 = vrot.slane %v1239, 1
      %v1303 = vsel %vm922, %v1300, %v1302
      %v1320 = vadd.f32 %v1187, %v1266
      %v1321 = vadd.f32 %v1188, %v1268
      %v1322 = vadd.f32 %v1189, %v1271
      %v1323 = vadd.f32 %v1190, %v1273
      %v1324 = vadd.f32 %v1191, %v1276
      %v1325 = vadd.f32 %v1192, %v1278
      %v1326 = vadd.f32 %v1193, %v1281
      %v1327 = vadd.f32 %v1194, %v1283
      %v1328 = vadd.f32 %v1195, %v1286
      %v1329 = vadd.f32 %v1196, %v1288
      %v1330 = vadd.f32 %v1197, %v1291
      %v1331 = vadd.f32 %v1198, %v1293
      %v1332 = vadd.f32 %v1199, %v1296
      %v1333 = vadd.f32 %v1200, %v1298
      %v1334 = vadd.f32 %v1201, %v1301
      %v1335 = vadd.f32 %v1202, %v1303
      %v1336 = vld [vmem:[%s1165 + $0x2] sm:$0x1]
      %v1337 = vlaneseq
      %v1338 = vshrl.u32 %v1337, 7
      %v1339 = vsub.s32 0, %v1338
      %v1340 = vrot.slane %v1336, %v1339
      %v1341 = vmul.f32 %v1149, %v1340
      %v1342 = vmul.f32 %v1150, %v1340
      %v1343 = vmul.f32 %v1203, %v1340
      %v1344 = vmul.f32 %v1151, %v1340
      %v1345 = vmul.f32 %v1152, %v1340
      %v1346 = vmul.f32 %v1204, %v1340
      %v1347 = vmul.f32 %v1153, %v1340
      %v1348 = vmul.f32 %v1154, %v1340
      %v1349 = vmul.f32 %v1205, %v1340
      %v1350 = vmul.f32 %v1155, %v1340
      %v1351 = vmul.f32 %v1156, %v1340
      %v1352 = vmul.f32 %v1206, %v1340
      %v1353 = vmul.f32 %v1157, %v1340
      %v1354 = vmul.f32 %v1158, %v1340
      %v1355 = vmul.f32 %v1207, %v1340
      %v1356 = vmul.f32 %v1159, %v1340
      %v1357 = vmul.f32 %v1160, %v1340
      %v1358 = vmul.f32 %v1208, %v1340
      %v1359 = vmul.f32 %v1161, %v1340
      %v1360 = vmul.f32 %v1162, %v1340
      %v1361 = vmul.f32 %v1209, %v1340
      %v1362 = vmul.f32 %v1163, %v1340
      %v1363 = vmul.f32 %v1164, %v1340
      %v1364 = vmul.f32 %v1210, %v1340
      %v1389 = vrot.slane %v1341, 2
      %v1390 = vrot.slane %v1342, 2
      %v1391 = vsel %vm1048, %v1389, %v1390
      %v1392 = vrot.slane %v1343, 2
      %v1393 = vsel %vm1048, %v1390, %v1392
      %v1394 = vrot.slane %v1344, 2
      %v1395 = vrot.slane %v1345, 2
      %v1396 = vsel %vm1048, %v1394, %v1395
      %v1397 = vrot.slane %v1346, 2
      %v1398 = vsel %vm1048, %v1395, %v1397
      %v1399 = vrot.slane %v1347, 2
      %v1400 = vrot.slane %v1348, 2
      %v1401 = vsel %vm1048, %v1399, %v1400
      %v1402 = vrot.slane %v1349, 2
      %v1403 = vsel %vm1048, %v1400, %v1402
      %v1404 = vrot.slane %v1350, 2
      %v1405 = vrot.slane %v1351, 2
      %v1406 = vsel %vm1048, %v1404, %v1405
      %v1407 = vrot.slane %v1352, 2
      %v1408 = vsel %vm1048, %v1405, %v1407
      %v1409 = vrot.slane %v1353, 2
      %v1410 = vrot.slane %v1354, 2
      %v1411 = vsel %vm1048, %v1409, %v1410
      %v1412 = vrot.slane %v1355, 2
      %v1413 = vsel %vm1048, %v1410, %v1412
      %v1414 = vrot.slane %v1356, 2
      %v1415 = vrot.slane %v1357, 2
      %v1416 = vsel %vm1048, %v1414, %v1415
      %v1417 = vrot.slane %v1358, 2
      %v1418 = vsel %vm1048, %v1415, %v1417
      %v1419 = vrot.slane %v1359, 2
      %v1420 = vrot.slane %v1360, 2
      %v1421 = vsel %vm1048, %v1419, %v1420
      %v1422 = vrot.slane %v1361, 2
      %v1423 = vsel %vm1048, %v1420, %v1422
      %v1424 = vrot.slane %v1362, 2
      %v1425 = vrot.slane %v1363, 2
      %v1426 = vsel %vm1048, %v1424, %v1425
      %v1427 = vrot.slane %v1364, 2
      %v1428 = vsel %vm1048, %v1425, %v1427
      %v1445 = vadd.f32 %v1320, %v1391
      %v1446 = vadd.f32 %v1321, %v1393
      %v1447 = vadd.f32 %v1322, %v1396
      %v1448 = vadd.f32 %v1323, %v1398
      %v1449 = vadd.f32 %v1324, %v1401
      %v1450 = vadd.f32 %v1325, %v1403
      %v1451 = vadd.f32 %v1326, %v1406
      %v1452 = vadd.f32 %v1327, %v1408
      %v1453 = vadd.f32 %v1328, %v1411
      %v1454 = vadd.f32 %v1329, %v1413
      %v1455 = vadd.f32 %v1330, %v1416
      %v1456 = vadd.f32 %v1331, %v1418
      %v1457 = vadd.f32 %v1332, %v1421
      %v1458 = vadd.f32 %v1333, %v1423
      %v1459 = vadd.f32 %v1334, %v1426
      %v1460 = vadd.f32 %v1335, %v1428
      %s1461 = sadd.s32 %s780, 2
      %s1462 = smul.u32 %s1461, 3
      %s1463 = smul.addr %s1462, 4
      %s1464 = scalar_lea.vmem [#allocation2], %s1463
      %v1465 = vld [vmem:[%s1464] sm:$0xf]
      %v1466 = vld [vmem:[%s1464 + $0x4] sm:$0xf]
      %v1467 = vld [vmem:[%s1464 + $0x8] sm:$0x1]
      %v1468 = vld [vmem:[%s1464 + $0xc] sm:$0xf]
      %v1469 = vld [vmem:[%s1464 + $0x10] sm:$0xf]
      %v1470 = vld [vmem:[%s1464 + $0x14] sm:$0x1]
      %v1471 = vld [vmem:[%s1464 + $0x18] sm:$0xf]
      %v1472 = vld [vmem:[%s1464 + $0x1c] sm:$0xf]
      %v1473 = vld [vmem:[%s1464 + $0x20] sm:$0x1]
      %v1474 = vld [vmem:[%s1464 + $0x24] sm:$0xf]
      %v1475 = vld [vmem:[%s1464 + $0x28] sm:$0xf]
      %v1476 = vld [vmem:[%s1464 + $0x2c] sm:$0x1]
      %v1477 = vld [vmem:[%s1464 + $0x30] sm:$0xf]
      %v1478 = vld [vmem:[%s1464 + $0x34] sm:$0xf]
      %v1479 = vld [vmem:[%s1464 + $0x38] sm:$0x1]
      %v1480 = vld [vmem:[%s1464 + $0x3c] sm:$0xf]
      %v1481 = vld [vmem:[%s1464 + $0x40] sm:$0xf]
      %v1482 = vld [vmem:[%s1464 + $0x44] sm:$0x1]
      %v1483 = vld [vmem:[%s1464 + $0x48] sm:$0xf]
      %v1484 = vld [vmem:[%s1464 + $0x4c] sm:$0xf]
      %v1485 = vld [vmem:[%s1464 + $0x50] sm:$0x1]
      %v1486 = vld [vmem:[%s1464 + $0x54] sm:$0xf]
      %v1487 = vld [vmem:[%s1464 + $0x58] sm:$0xf]
      %v1488 = vld [vmem:[%s1464 + $0x5c] sm:$0x1]
      %v1489 = vunpack.c.l.bf16 %v1465
      %v1490 = vunpack.c.l.bf16 %v1466
      %v1491 = vunpack.c.l.bf16 %v1468
      %v1492 = vunpack.c.l.bf16 %v1469
      %v1493 = vunpack.c.l.bf16 %v1471
      %v1494 = vunpack.c.l.bf16 %v1472
      %v1495 = vunpack.c.l.bf16 %v1474
      %v1496 = vunpack.c.l.bf16 %v1475
      %v1497 = vunpack.c.l.bf16 %v1477
      %v1498 = vunpack.c.l.bf16 %v1478
      %v1499 = vunpack.c.l.bf16 %v1480
      %v1500 = vunpack.c.l.bf16 %v1481
      %v1501 = vunpack.c.l.bf16 %v1483
      %v1502 = vunpack.c.l.bf16 %v1484
      %v1503 = vunpack.c.l.bf16 %v1486
      %v1504 = vunpack.c.l.bf16 %v1487
      %s1505 = scalar_lea.vmem %s1, 8
      %v1506 = vld [vmem:[%s1505] sm:$0x1]
      %v1507 = vlaneseq
      %v1508 = vshrl.u32 %v1507, 7
      %v1509 = vsub.s32 0, %v1508
      %v1510 = vrot.slane %v1506, %v1509
      %v1511 = vmul.f32 %v1489, %v1510
      %v1512 = vmul.f32 %v1490, %v1510
      %v1513 = vmul.f32 %v1491, %v1510
      %v1514 = vmul.f32 %v1492, %v1510
      %v1515 = vmul.f32 %v1493, %v1510
      %v1516 = vmul.f32 %v1494, %v1510
      %v1517 = vmul.f32 %v1495, %v1510
      %v1518 = vmul.f32 %v1496, %v1510
      %v1519 = vmul.f32 %v1497, %v1510
      %v1520 = vmul.f32 %v1498, %v1510
      %v1521 = vmul.f32 %v1499, %v1510
      %v1522 = vmul.f32 %v1500, %v1510
      %v1523 = vmul.f32 %v1501, %v1510
      %v1524 = vmul.f32 %v1502, %v1510
      %v1525 = vmul.f32 %v1503, %v1510
      %v1526 = vmul.f32 %v1504, %v1510
      %v1527 = vadd.f32 %v1445, %v1511
      %v1528 = vadd.f32 %v1446, %v1512
      %v1529 = vadd.f32 %v1447, %v1513
      %v1530 = vadd.f32 %v1448, %v1514
      %v1531 = vadd.f32 %v1449, %v1515
      %v1532 = vadd.f32 %v1450, %v1516
      %v1533 = vadd.f32 %v1451, %v1517
      %v1534 = vadd.f32 %v1452, %v1518
      %v1535 = vadd.f32 %v1453, %v1519
      %v1536 = vadd.f32 %v1454, %v1520
      %v1537 = vadd.f32 %v1455, %v1521
      %v1538 = vadd.f32 %v1456, %v1522
      %v1539 = vadd.f32 %v1457, %v1523
      %v1540 = vadd.f32 %v1458, %v1524
      %v1541 = vadd.f32 %v1459, %v1525
      %v1542 = vadd.f32 %v1460, %v1526
      %v1543 = vunpack.c.l.bf16 %v1467
      %v1544 = vunpack.c.l.bf16 %v1470
      %v1545 = vunpack.c.l.bf16 %v1473
      %v1546 = vunpack.c.l.bf16 %v1476
      %v1547 = vunpack.c.l.bf16 %v1479
      %v1548 = vunpack.c.l.bf16 %v1482
      %v1549 = vunpack.c.l.bf16 %v1485
      %v1550 = vunpack.c.l.bf16 %v1488
      %v1551 = vld [vmem:[%s1505 + $0x1] sm:$0x1]
      %v1552 = vlaneseq
      %v1553 = vshrl.u32 %v1552, 7
      %v1554 = vsub.s32 0, %v1553
      %v1555 = vrot.slane %v1551, %v1554
      %v1556 = vmul.f32 %v1489, %v1555
      %v1557 = vmul.f32 %v1490, %v1555
      %v1558 = vmul.f32 %v1543, %v1555
      %v1559 = vmul.f32 %v1491, %v1555
      %v1560 = vmul.f32 %v1492, %v1555
      %v1561 = vmul.f32 %v1544, %v1555
      %v1562 = vmul.f32 %v1493, %v1555
      %v1563 = vmul.f32 %v1494, %v1555
      %v1564 = vmul.f32 %v1545, %v1555
      %v1565 = vmul.f32 %v1495, %v1555
      %v1566 = vmul.f32 %v1496, %v1555
      %v1567 = vmul.f32 %v1546, %v1555
      %v1568 = vmul.f32 %v1497, %v1555
      %v1569 = vmul.f32 %v1498, %v1555
      %v1570 = vmul.f32 %v1547, %v1555
      %v1571 = vmul.f32 %v1499, %v1555
      %v1572 = vmul.f32 %v1500, %v1555
      %v1573 = vmul.f32 %v1548, %v1555
      %v1574 = vmul.f32 %v1501, %v1555
      %v1575 = vmul.f32 %v1502, %v1555
      %v1576 = vmul.f32 %v1549, %v1555
      %v1577 = vmul.f32 %v1503, %v1555
      %v1578 = vmul.f32 %v1504, %v1555
      %v1579 = vmul.f32 %v1550, %v1555
      %v1604 = vrot.slane %v1556, 1
      %v1605 = vrot.slane %v1557, 1
      %v1606 = vsel %vm922, %v1604, %v1605
      %v1607 = vrot.slane %v1558, 1
      %v1608 = vsel %vm922, %v1605, %v1607
      %v1609 = vrot.slane %v1559, 1
      %v1610 = vrot.slane %v1560, 1
      %v1611 = vsel %vm922, %v1609, %v1610
      %v1612 = vrot.slane %v1561, 1
      %v1613 = vsel %vm922, %v1610, %v1612
      %v1614 = vrot.slane %v1562, 1
      %v1615 = vrot.slane %v1563, 1
      %v1616 = vsel %vm922, %v1614, %v1615
      %v1617 = vrot.slane %v1564, 1
      %v1618 = vsel %vm922, %v1615, %v1617
      %v1619 = vrot.slane %v1565, 1
      %v1620 = vrot.slane %v1566, 1
      %v1621 = vsel %vm922, %v1619, %v1620
      %v1622 = vrot.slane %v1567, 1
      %v1623 = vsel %vm922, %v1620, %v1622
      %v1624 = vrot.slane %v1568, 1
      %v1625 = vrot.slane %v1569, 1
      %v1626 = vsel %vm922, %v1624, %v1625
      %v1627 = vrot.slane %v1570, 1
      %v1628 = vsel %vm922, %v1625, %v1627
      %v1629 = vrot.slane %v1571, 1
      %v1630 = vrot.slane %v1572, 1
      %v1631 = vsel %vm922, %v1629, %v1630
      %v1632 = vrot.slane %v1573, 1
      %v1633 = vsel %vm922, %v1630, %v1632
      %v1634 = vrot.slane %v1574, 1
      %v1635 = vrot.slane %v1575, 1
      %v1636 = vsel %vm922, %v1634, %v1635
      %v1637 = vrot.slane %v1576, 1
      %v1638 = vsel %vm922, %v1635, %v1637
      %v1639 = vrot.slane %v1577, 1
      %v1640 = vrot.slane %v1578, 1
      %v1641 = vsel %vm922, %v1639, %v1640
      %v1642 = vrot.slane %v1579, 1
      %v1643 = vsel %vm922, %v1640, %v1642
      %v1660 = vadd.f32 %v1527, %v1606
      %v1661 = vadd.f32 %v1528, %v1608
      %v1662 = vadd.f32 %v1529, %v1611
      %v1663 = vadd.f32 %v1530, %v1613
      %v1664 = vadd.f32 %v1531, %v1616
      %v1665 = vadd.f32 %v1532, %v1618
      %v1666 = vadd.f32 %v1533, %v1621
      %v1667 = vadd.f32 %v1534, %v1623
      %v1668 = vadd.f32 %v1535, %v1626
      %v1669 = vadd.f32 %v1536, %v1628
      %v1670 = vadd.f32 %v1537, %v1631
      %v1671 = vadd.f32 %v1538, %v1633
      %v1672 = vadd.f32 %v1539, %v1636
      %v1673 = vadd.f32 %v1540, %v1638
      %v1674 = vadd.f32 %v1541, %v1641
      %v1675 = vadd.f32 %v1542, %v1643
      %v1676 = vld [vmem:[%s1505 + $0x2] sm:$0x1]
      %v1677 = vlaneseq
      %v1678 = vshrl.u32 %v1677, 7
      %v1679 = vsub.s32 0, %v1678
      %v1680 = vrot.slane %v1676, %v1679
      %v1681 = vmul.f32 %v1489, %v1680
      %v1682 = vmul.f32 %v1490, %v1680
      %v1683 = vmul.f32 %v1543, %v1680
      %v1684 = vmul.f32 %v1491, %v1680
      %v1685 = vmul.f32 %v1492, %v1680
      %v1686 = vmul.f32 %v1544, %v1680
      %v1687 = vmul.f32 %v1493, %v1680
      %v1688 = vmul.f32 %v1494, %v1680
      %v1689 = vmul.f32 %v1545, %v1680
      %v1690 = vmul.f32 %v1495, %v1680
      %v1691 = vmul.f32 %v1496, %v1680
      %v1692 = vmul.f32 %v1546, %v1680
      %v1693 = vmul.f32 %v1497, %v1680
      %v1694 = vmul.f32 %v1498, %v1680
      %v1695 = vmul.f32 %v1547, %v1680
      %v1696 = vmul.f32 %v1499, %v1680
      %v1697 = vmul.f32 %v1500, %v1680
      %v1698 = vmul.f32 %v1548, %v1680
      %v1699 = vmul.f32 %v1501, %v1680
      %v1700 = vmul.f32 %v1502, %v1680
      %v1701 = vmul.f32 %v1549, %v1680
      %v1702 = vmul.f32 %v1503, %v1680
      %v1703 = vmul.f32 %v1504, %v1680
      %v1704 = vmul.f32 %v1550, %v1680
      %v1729 = vrot.slane %v1681, 2
      %v1730 = vrot.slane %v1682, 2
      %v1731 = vsel %vm1048, %v1729, %v1730
      %v1732 = vrot.slane %v1683, 2
      %v1733 = vsel %vm1048, %v1730, %v1732
      %v1734 = vrot.slane %v1684, 2
      %v1735 = vrot.slane %v1685, 2
      %v1736 = vsel %vm1048, %v1734, %v1735
      %v1737 = vrot.slane %v1686, 2
      %v1738 = vsel %vm1048, %v1735, %v1737
      %v1739 = vrot.slane %v1687, 2
      %v1740 = vrot.slane %v1688, 2
      %v1741 = vsel %vm1048, %v1739, %v1740
      %v1742 = vrot.slane %v1689, 2
      %v1743 = vsel %vm1048, %v1740, %v1742
      %v1744 = vrot.slane %v1690, 2
      %v1745 = vrot.slane %v1691, 2
      %v1746 = vsel %vm1048, %v1744, %v1745
      %v1747 = vrot.slane %v1692, 2
      %v1748 = vsel %vm1048, %v1745, %v1747
      %v1749 = vrot.slane %v1693, 2
      %v1750 = vrot.slane %v1694, 2
      %v1751 = vsel %vm1048, %v1749, %v1750
      %v1752 = vrot.slane %v1695, 2
      %v1753 = vsel %vm1048, %v1750, %v1752
      %v1754 = vrot.slane %v1696, 2
      %v1755 = vrot.slane %v1697, 2
      %v1756 = vsel %vm1048, %v1754, %v1755
      %v1757 = vrot.slane %v1698, 2
      %v1758 = vsel %vm1048, %v1755, %v1757
      %v1759 = vrot.slane %v1699, 2
      %v1760 = vrot.slane %v1700, 2
      %v1761 = vsel %vm1048, %v1759, %v1760
      %v1762 = vrot.slane %v1701, 2
      %v1763 = vsel %vm1048, %v1760, %v1762
      %v1764 = vrot.slane %v1702, 2
      %v1765 = vrot.slane %v1703, 2
      %v1766 = vsel %vm1048, %v1764, %v1765
      %v1767 = vrot.slane %v1704, 2
      %v1768 = vsel %vm1048, %v1765, %v1767
      %v1785 = vadd.f32 %v1660, %v1731
      %v1786 = vadd.f32 %v1661, %v1733
      %v1787 = vadd.f32 %v1662, %v1736
      %v1788 = vadd.f32 %v1663, %v1738
      %v1789 = vadd.f32 %v1664, %v1741
      %v1790 = vadd.f32 %v1665, %v1743
      %v1791 = vadd.f32 %v1666, %v1746
      %v1792 = vadd.f32 %v1667, %v1748
      %v1793 = vadd.f32 %v1668, %v1751
      %v1794 = vadd.f32 %v1669, %v1753
      %v1795 = vadd.f32 %v1670, %v1756
      %v1796 = vadd.f32 %v1671, %v1758
      %v1797 = vadd.f32 %v1672, %v1761
      %v1798 = vadd.f32 %v1673, %v1763
      %v1799 = vadd.f32 %v1674, %v1766
      %v1800 = vadd.f32 %v1675, %v1768
      %v1801 = vld [vmem:[%s2] sm:$0x1]
      %v1803 = vlaneseq
      %v1804 = vshrl.u32 %v1803, 7
      %v1805 = vsub.s32 0, %v1804
      %v1806 = vrot.slane %v1801, %v1805
      %v1808 = vadd.f32 %v1785, %v1806
      %v1809 = vadd.f32 %v1786, %v1806
      %v1810 = vadd.f32 %v1787, %v1806
      %v1811 = vadd.f32 %v1788, %v1806
      %v1812 = vadd.f32 %v1789, %v1806
      %v1813 = vadd.f32 %v1790, %v1806
      %v1814 = vadd.f32 %v1791, %v1806
      %v1815 = vadd.f32 %v1792, %v1806
      %v1816 = vadd.f32 %v1793, %v1806
      %v1817 = vadd.f32 %v1794, %v1806
      %v1818 = vadd.f32 %v1795, %v1806
      %v1819 = vadd.f32 %v1796, %v1806
      %v1820 = vadd.f32 %v1797, %v1806
      %v1821 = vadd.f32 %v1798, %v1806
      %v1822 = vadd.f32 %v1799, %v1806
      %v1823 = vadd.f32 %v1800, %v1806
      %v1824 = vmax.f32 %v1808, 0.0
      %v1825 = vmax.f32 %v1809, 0.0
      %v1826 = vmax.f32 %v1810, 0.0
      %v1827 = vmax.f32 %v1811, 0.0
      %v1828 = vmax.f32 %v1812, 0.0
      %v1829 = vmax.f32 %v1813, 0.0
      %v1830 = vmax.f32 %v1814, 0.0
      %v1831 = vmax.f32 %v1815, 0.0
      %v1832 = vmax.f32 %v1816, 0.0
      %v1833 = vmax.f32 %v1817, 0.0
      %v1834 = vmax.f32 %v1818, 0.0
      %v1835 = vmax.f32 %v1819, 0.0
      %v1836 = vmax.f32 %v1820, 0.0
      %v1837 = vmax.f32 %v1821, 0.0
      %v1838 = vmax.f32 %v1822, 0.0
      %v1839 = vmax.f32 %v1823, 0.0
      %v1840 = vpack.c.bf16 %v1825, %v1824
      %v1841 = vpack.c.bf16 %v1827, %v1826
      %v1842 = vpack.c.bf16 %v1829, %v1828
      %v1843 = vpack.c.bf16 %v1831, %v1830
      %v1844 = vpack.c.bf16 %v1833, %v1832
      %v1845 = vpack.c.bf16 %v1835, %v1834
      %v1846 = vpack.c.bf16 %v1837, %v1836
      %v1847 = vpack.c.bf16 %v1839, %v1838
      %v1856 = vunpack.c.l.b16 %v1840
      %v1857 = vunpack.c.h.b16 %v1840
      %v1858 = vunpack.c.l.b16 %v1841
      %v1859 = vunpack.c.h.b16 %v1841
      %v1860 = vunpack.c.l.b16 %v1842
      %v1861 = vunpack.c.h.b16 %v1842
      %v1862 = vunpack.c.l.b16 %v1843
      %v1863 = vunpack.c.h.b16 %v1843
      %v1864 = vunpack.c.l.b16 %v1844
      %v1865 = vunpack.c.h.b16 %v1844
      %v1866 = vunpack.c.l.b16 %v1845
      %v1867 = vunpack.c.h.b16 %v1845
      %v1868 = vunpack.c.l.b16 %v1846
      %v1869 = vunpack.c.h.b16 %v1846
      %v1870 = vunpack.c.l.b16 %v1847
      %v1871 = vunpack.c.h.b16 %v1847
      %v1872 = vpack.c.b16 %v1856, %v1856
      %v1873 = vpack.c.b16 %v1857, %v1857
      %v1874 = vpack.c.b16 %v1858, %v1858
      %v1875 = vpack.c.b16 %v1859, %v1859
      %v1876 = vpack.c.b16 %v1860, %v1860
      %v1877 = vpack.c.b16 %v1861, %v1861
      %v1878 = vpack.c.b16 %v1862, %v1862
      %v1879 = vpack.c.b16 %v1863, %v1863
      %v1880 = vpack.c.b16 %v1864, %v1864
      %v1881 = vpack.c.b16 %v1865, %v1865
      %v1882 = vpack.c.b16 %v1866, %v1866
      %v1883 = vpack.c.b16 %v1867, %v1867
      %v1884 = vpack.c.b16 %v1868, %v1868
      %v1885 = vpack.c.b16 %v1869, %v1869
      %v1886 = vpack.c.b16 %v1870, %v1870
      %v1887 = vpack.c.b16 %v1871, %v1871
      %vm1904 = vcmask 60416
      %1905 = vst.msk [vmem:[%s194] sm:$0xf] %vm1904, %v1872
      %1906 = vst.msk [vmem:[%s194 + $0x4] sm:$0xf] %vm1904, %v1873
      %1907 = vst.msk [vmem:[%s194 + $0x8] sm:$0xf] %vm1904, %v1874
      %1908 = vst.msk [vmem:[%s194 + $0xc] sm:$0xf] %vm1904, %v1875
      %1909 = vst.msk [vmem:[%s194 + $0x10] sm:$0xf] %vm1904, %v1876
      %1910 = vst.msk [vmem:[%s194 + $0x14] sm:$0xf] %vm1904, %v1877
      %1911 = vst.msk [vmem:[%s194 + $0x18] sm:$0xf] %vm1904, %v1878
      %1912 = vst.msk [vmem:[%s194 + $0x1c] sm:$0xf] %vm1904, %v1879
      %1913 = vst.msk [vmem:[%s194 + $0x20] sm:$0xf] %vm1904, %v1880
      %1914 = vst.msk [vmem:[%s194 + $0x24] sm:$0xf] %vm1904, %v1881
      %1915 = vst.msk [vmem:[%s194 + $0x28] sm:$0xf] %vm1904, %v1882
      %1916 = vst.msk [vmem:[%s194 + $0x2c] sm:$0xf] %vm1904, %v1883
      %1917 = vst.msk [vmem:[%s194 + $0x30] sm:$0xf] %vm1904, %v1884
      %1918 = vst.msk [vmem:[%s194 + $0x34] sm:$0xf] %vm1904, %v1885
      %1919 = vst.msk [vmem:[%s194 + $0x38] sm:$0xf] %vm1904, %v1886
      %1920 = vst.msk [vmem:[%s194 + $0x3c] sm:$0xf] %vm1904, %v1887
      %s1921 = smul.u32 8, %s19
      %p1922 = scmp.lt.s32.totalorder %s18, 1
      %s1923 = scalar_select %p1922, %s18, 1
      %p1924 = scmp.lt.s32.totalorder %s1921, 15
      %s1925 = scalar_select %p1924, %s1921, 15
      %s1926 = smul.addr %s1925, 2
      %s1927 = smul.addr %s1923, 32
      %s1928 = sadd.s32 %s1926, %s1927
      %s1929 = smul.addr %s1928, 4
      %s1930 = scalar_lea.vmem %s3, %s1929
      // Predicated region
      $region37: #{tpu_custom_call.1} parent=31 // pred_check
        %p1931 = pneg %p114
      $region38: #{tpu_custom_call.1} parent=31 // pred_check_branch
        %1933 = sbr.rel (%p1931) target = $region40
      $region39: #{tpu_custom_call.1} parent=31 // pred_region
        %s1934 = smul.u32 8, %s19
      $region40: #{tpu_custom_call.1} parent=31 // pred_fallthru
        _
    $region32: #{tpu_custom_call.1} parent=5 // pred_fallthru
      _
    %p1935 = scmp.le.s32.totalorder 2, %s9
    // Predicated region
    $region41: #{tpu_custom_call.1} parent=5 // pred_check
      %p1936 = pneg %p1935
    $region42: #{tpu_custom_call.1} parent=5 // pred_check_branch
      %1938 = sbr.rel (%p1936) target = $region44
    $region43: #{tpu_custom_call.1} parent=5 // pred_region
      %s1939 = ssub.s32 %s9, 2
      // Predicated region
      $region45: #{tpu_custom_call.1} parent=43 // pred_check
        %p1940 = pneg %p120
      $region46: #{tpu_custom_call.1} parent=43 // pred_check_branch
        %1942 = sbr.rel (%p1940) target = $region48
      $region47: #{tpu_custom_call.1} parent=43 // pred_region
        %s1943 = smul.u32 8, %s21
        %p1944 = scmp.lt.s32.totalorder %s20, 1
        %s1945 = scalar_select %p1944, %s20, 1
        %p1946 = scmp.lt.s32.totalorder %s1943, 15
        %s1947 = scalar_select %p1946, %s1943, 15
        %s1948 = smul.addr %s1947, 2
        %s1949 = smul.addr %s1945, 32
        %s1950 = sadd.s32 %s1948, %s1949
        %s1951 = smul.addr %s1950, 4
        %s1952 = scalar_lea.vmem %s3, %s1951
      $region48: #{tpu_custom_call.1} parent=43 // pred_fallthru
        _
    $region44: #{tpu_custom_call.1} parent=5 // pred_fallthru
      _
  $region6: #{tpu_custom_call.1} parent=0 // loop_footer
    %s13 = sadd.s32 1, %s9
  $region7: #{tpu_custom_call.1} parent=0 // loop_footer_branch
    %8 = sbr.rel target = $region3
  $region8: #{tpu_custom_call.1} parent=0 // loop_exit
    _

</llo_original>
